<compile_context>
chip_gen: v6e
topology: v6e:2x2x1
jax: 0.10.0
libtpu: 0.0.40
codegen_flags: <defaults>
</compile_context>

<pallas_src>
import jax
import jax.numpy as jnp
from jax import lax
from jax.experimental import pallas as pl
from jax.experimental.pallas import tpu as pltpu

B, T, E, H, V, C = 2, 8, 16, 16, 32, 4
H2 = 2 * H          # 32   fused per-gate width ([fwd | bwd] interleaved)
G8 = 8 * H          # 128  fused gate width -> one lane-dense vreg row
F = E + 2 * H       # 48   fc input features = cat(embed, h_fwd, h_bwd)
OUT_PAD = 128       # lane-dense padded head output width


# ----------------------------------------------------------------------------
# Fused kernel.
#   tokf_ref: (T*B, 1) int32 VMEM   time-major token ids
#   tokb_ref: (T*B, 1) int32 VMEM   time-REVERSED token ids (bwd direction)
#   emb_ref : (V, E)  bf16          embedding table
#   tabf_ref: (V, 8H) bf16          emb @ W_ih_fwd placed at fwd gate columns
#   tabb_ref: (V, 8H) bf16          emb @ W_ih_bwd placed at bwd gate columns
#   whh_ref : (2H, 8H) bf16         block-diag recurrent weight, interleaved cols
#   bg_ref  : (1, 8H) f32           fused gate bias (b_ih + b_hh, both dirs)
#   wfce_ref: (E, 128) bf16         fc rows for embed features, C cols zero-padded
#   wfch_ref: (2H, 128) bf16        fc rows for [h_f | h_b] features
#   bfc_ref : (1, 128) f32
#   out_ref : (B, 128) f32          lane-dense; wrapper slices to (B, C)
# ----------------------------------------------------------------------------
def textrcnn_kernel(tokf_ref, tokb_ref, emb_ref, tabf_ref, tabb_ref, whh_ref,
                    bg_ref, wfce_ref, wfch_ref, bfc_ref, out_ref):
    # ---- 1) One-hot gather (VPU iota + compare) + folded input projection.
    lane = lax.broadcasted_iota(jnp.int32, (T * B, V), 1)
    oh_f = (lane == tokf_ref[...]).astype(jnp.bfloat16)        # (T*B, V)
    oh_b = (lane == tokb_ref[...]).astype(jnp.bfloat16)        # time-reversed

    # Raw embeddings (time-major), only needed for the max-pool "embed" path.
    x = jnp.dot(oh_f, emb_ref[...], preferred_element_type=jnp.float32)  # (T*B,E)

    # Per-step packed gates for BOTH directions in interleaved column order
    # [i_f i_b | f_f f_b | g_f g_b | o_f o_b]; bwd half is already time-
    # reversed via oh_b, so each recurrence step reads one contiguous row.
    gin = (jnp.dot(oh_f, tabf_ref[...], preferred_element_type=jnp.float32)
           + jnp.dot(oh_b, tabb_ref[...], preferred_element_type=jnp.float32)
           + bg_ref[...])                                      # (T*B, 8H)

    # ---- 2) Online max-over-time of the embedding features (off the serial
    #         recurrence chain; scheduler interleaves it freely).
    pooled_e = x[0:B, :]
    for s in range(1, T):
        pooled_e = jnp.maximum(pooled_e, x[s * B:(s + 1) * B, :])

    # ---- 3) Fused bidirectional recurrence, fully unrolled over T.
    whh = whh_ref[...]                                         # (2H, 8H) bf16
    h = jnp.zeros((B, H2), jnp.float32)                        # [h_f | h_b]
    c = jnp.zeros((B, H2), jnp.float32)                        # [c_f | c_b]
    pooled_h = jnp.full((B, H2), -jnp.inf, jnp.float32)

    for s in range(T):                                         # static -> unrolled
        g8 = gin[s * B:(s + 1) * B, :] + jnp.dot(
            h.astype(jnp.bfloat16), whh, preferred_element_type=jnp.float32)
        i = jax.nn.sigmoid(g8[:, 0 * H2:1 * H2])               # f32 elementwise
        f = jax.nn.sigmoid(g8[:, 1 * H2:2 * H2])
        g = jnp.tanh(g8[:, 2 * H2:3 * H2])
        o = jax.nn.sigmoid(g8[:, 3 * H2:4 * H2])
        c = f * c + i * g                                      # both dirs at once
        h = o * jnp.tanh(c)                                    # (B, 2H) = [h_f|h_b]
        pooled_h = jnp.maximum(pooled_h, h)                    # online max-over-time

    # ---- 4) Head: ReLU after max (exact; ReLU is monotone), split fc,
    #         lane-dense (B, 128) store.
    feat_e = jnp.maximum(pooled_e, 0.0).astype(jnp.bfloat16)
    feat_h = jnp.maximum(pooled_h, 0.0).astype(jnp.bfloat16)
    out_ref[...] = (
        jnp.dot(feat_e, wfce_ref[...], preferred_element_type=jnp.float32)
        + jnp.dot(feat_h, wfch_ref[...], preferred_element_type=jnp.float32)
        + bfc_ref[...])


@jax.jit
def textrcnn_forward(tokens, params):
    tok_tm = tokens.astype(jnp.int32).T                        # (T, B) time-major
    ids_f = tok_tm.reshape(T * B, 1)
    ids_b = tok_tm[::-1].reshape(T * B, 1)                     # time-reversed ids
    out = pl.pallas_call(
        textrcnn_kernel,
        out_shape=jax.ShapeDtypeStruct((B, OUT_PAD), jnp.float32),
        in_specs=[pl.BlockSpec(memory_space=pltpu.MemorySpace.VMEM)] * 10,
        out_specs=pl.BlockSpec(memory_space=pltpu.MemorySpace.VMEM),
    )(ids_f, ids_b, params["emb"], params["tabf"], params["tabb"],
      params["whh"], params["bg"], params["wfce"], params["wfch"],
      params["bfc"])
    return out[:, :C]


# ----------------------------------------------------------------------------
# Deterministic parameter init (PyTorch layout) + fused kernel-side layout.
# ----------------------------------------------------------------------------
def init_params(key):
    keys = jax.random.split(key, 10)
    s = 0.1
    emb = s * jax.random.normal(keys[0], (V, E), jnp.float32)
    emb = emb.at[V - 1].set(0.0)                      # padding_idx = n_vocab-1

    def lstm_dir(k1, k2, k3, k4):
        w_ih = s * jax.random.normal(k1, (4 * H, E), jnp.float32)
        w_hh = s * jax.random.normal(k2, (4 * H, H), jnp.float32)
        b_ih = s * jax.random.normal(k3, (4 * H,), jnp.float32)
        b_hh = s * jax.random.normal(k4, (4 * H,), jnp.float32)
        return w_ih, w_hh, b_ih, b_hh

    wih_f, whh_f, bih_f, bhh_f = lstm_dir(keys[1], keys[2], keys[3], keys[4])
    wih_b, whh_b, bih_b, bhh_b = lstm_dir(keys[5], keys[6], keys[7], keys[8])

    # fc: Linear(E + 2H, C); fc input = cat(embed, lstm_out) = [emb|h_f|h_b]
    w_fc = s * jax.random.normal(keys[9], (C, F), jnp.float32)
    b_fc = jnp.zeros((C,), jnp.float32)

    raw = dict(emb=emb, wih_f=wih_f, whh_f=whh_f, bih_f=bih_f, bhh_f=bhh_f,
               wih_b=wih_b, whh_b=whh_b, bih_b=bih_b, bhh_b=bhh_b,
               w_fc=w_fc, b_fc=b_fc)

    # ---- Fused kernel-side layout -------------------------------------------
    def interleave_gate_cols(mat_f, mat_b):
        # (rows, 4H) in PyTorch gate order [i,f,g,o] per direction ->
        # (rows, 8H) with columns [i_f i_b | f_f f_b | g_f g_b | o_f o_b]
        blocks = []
        for k in range(4):
            blocks.append(mat_f[:, k * H:(k + 1) * H])
            blocks.append(mat_b[:, k * H:(k + 1) * H])
        return jnp.concatenate(blocks, axis=1)

    zE = jnp.zeros((E, 4 * H), jnp.float32)
    zH = jnp.zeros((H, 4 * H), jnp.float32)
    # Folded embedding -> gate tables (the one-hot matmul gather emits packed,
    # bias-free per-step gates for each direction directly).
    tabf = jnp.dot(emb, interleave_gate_cols(wih_f.T, zE))      # (V, 8H)
    tabb = jnp.dot(emb, interleave_gate_cols(zE, wih_b.T))      # (V, 8H)
    # Block-diagonal recurrent weight in the interleaved column order.
    whh = interleave_gate_cols(jnp.concatenate([whh_f.T, zH], axis=0),
                               jnp.concatenate([zH, whh_b.T], axis=0))  # (2H,8H)
    bg = interleave_gate_cols((bih_f + bhh_f)[None, :],
                              (bih_b + bhh_b)[None, :])          # (1, 8H)

    # Head weights split by feature group, class dim zero-padded to 128 lanes.
    wfc_t = w_fc.T                                               # (F, C)
    wfce = jnp.zeros((E, OUT_PAD), jnp.float32).at[:, :C].set(wfc_t[:E])
    wfch = jnp.zeros((2 * H, OUT_PAD), jnp.float32).at[:, :C].set(wfc_t[E:])
    bfc = jnp.zeros((1, OUT_PAD), jnp.float32).at[:, :C].set(b_fc[None, :])

    params = dict(
        emb=emb.astype(jnp.bfloat16),
        tabf=tabf.astype(jnp.bfloat16),
        tabb=tabb.astype(jnp.bfloat16),
        whh=whh.astype(jnp.bfloat16),
        bg=bg,                                                   # f32
        wfce=wfce.astype(jnp.bfloat16),
        wfch=wfch.astype(jnp.bfloat16),
        bfc=bfc,                                                 # f32
    )
    return params, raw


# ----------------------------------------------------------------------------
# Pure-JAX reference (standard batch-first biLSTM formulation) for validation.
# ----------------------------------------------------------------------------
def reference_forward(tokens, raw):
    hp = lax.Precision.HIGHEST
    embed = raw["emb"][tokens]                                   # (B, T, E)

    def run_dir(xs, w_ih, w_hh, b):
        h = jnp.zeros((B, H), jnp.float32)
        c = jnp.zeros((B, H), jnp.float32)
        hs = []
        for t in range(T):
            g = (jnp.dot(xs[:, t], w_ih.T, precision=hp)
                 + jnp.dot(h, w_hh.T, precision=hp) + b)
            i = jax.nn.sigmoid(g[:, 0:H])
            f = jax.nn.sigmoid(g[:, H:2 * H])
            gg = jnp.tanh(g[:, 2 * H:3 * H])
            o = jax.nn.sigmoid(g[:, 3 * H:4 * H])
            c = f * c + i * gg
            h = o * jnp.tanh(c)
            hs.append(h)
        return jnp.stack(hs, axis=1)                             # (B, T, H)

    hf = run_dir(embed, raw["wih_f"], raw["whh_f"], raw["bih_f"] + raw["bhh_f"])
    hb = run_dir(embed[:, ::-1], raw["wih_b"], raw["whh_b"],
                 raw["bih_b"] + raw["bhh_b"])[:, ::-1]
    cat = jnp.concatenate([embed, hf, hb], axis=2)               # (B, T, F)
    pooled = jnp.max(jax.nn.relu(cat), axis=1)                   # (B, F)
    return jnp.dot(pooled, raw["w_fc"].T, precision=hp) + raw["b_fc"]


if __name__ == "__main__":
    key = jax.random.PRNGKey(0)
    k_tok, k_param = jax.random.split(key)
    tokens = jax.random.randint(k_tok, (B, T), 0, V, dtype=jnp.int32)
    params, raw = init_params(k_param)

    out = textrcnn_forward(tokens, params)
    jax.block_until_ready(out)
    assert out.shape == (B, C), out.shape

    ref = reference_forward(tokens, raw)
    err = float(jnp.max(jnp.abs(out - ref)))
    assert err < 1e-2, err
    print("KERNEL_OK")
</pallas_src>

<mosaic_0001>
module attributes {stable_mosaic.version = 11 : i64} {
  func.func @textrcnn_kernel(%arg0: memref<16x1xi32, #tpu.memory_space<vmem>>, %arg1: memref<16x1xi32, #tpu.memory_space<vmem>>, %arg2: memref<32x16xbf16, #tpu.memory_space<vmem>>, %arg3: memref<32x128xbf16, #tpu.memory_space<vmem>>, %arg4: memref<32x128xbf16, #tpu.memory_space<vmem>>, %arg5: memref<32x128xbf16, #tpu.memory_space<vmem>>, %arg6: memref<1x128xf32, #tpu.memory_space<vmem>>, %arg7: memref<16x128xbf16, #tpu.memory_space<vmem>>, %arg8: memref<32x128xbf16, #tpu.memory_space<vmem>>, %arg9: memref<1x128xf32, #tpu.memory_space<vmem>>, %arg10: memref<2x128xf32, #tpu.memory_space<vmem>>) attributes {dimension_semantics = [], scalar_prefetch = 0 : i64, scratch_operands = 0 : i64, tpu.core_type = #tpu.core_type<tc>} {
    %0 = tpu.iota {dimensions = array<i32: 1>} : vector<16x32xi32>
    %c0 = arith.constant 0 : index
    %c0_0 = arith.constant 0 : index
    %1 = vector.load %arg0[%c0, %c0_0] : memref<16x1xi32, #tpu.memory_space<vmem>>, vector<16x1xi32>
    %2 = vector.broadcast %1 : vector<16x1xi32> to vector<16x32xi32>
    %3 = arith.cmpi eq, %0, %2 : vector<16x32xi32>
    %4 = arith.extui %3 : vector<16x32xi1> to vector<16x32xi32>
    %5 = arith.sitofp %4 : vector<16x32xi32> to vector<16x32xf32>
    %6 = arith.truncf %5 : vector<16x32xf32> to vector<16x32xbf16>
    %c0_1 = arith.constant 0 : index
    %c0_2 = arith.constant 0 : index
    %7 = vector.load %arg1[%c0_1, %c0_2] : memref<16x1xi32, #tpu.memory_space<vmem>>, vector<16x1xi32>
    %8 = vector.broadcast %7 : vector<16x1xi32> to vector<16x32xi32>
    %9 = arith.cmpi eq, %0, %8 : vector<16x32xi32>
    %10 = arith.extui %9 : vector<16x32xi1> to vector<16x32xi32>
    %11 = arith.sitofp %10 : vector<16x32xi32> to vector<16x32xf32>
    %12 = arith.truncf %11 : vector<16x32xf32> to vector<16x32xbf16>
    %c0_3 = arith.constant 0 : index
    %c0_4 = arith.constant 0 : index
    %13 = vector.load %arg2[%c0_3, %c0_4] : memref<32x16xbf16, #tpu.memory_space<vmem>>, vector<32x16xbf16>
    %cst = arith.constant dense<0.000000e+00> : vector<16x16xf32>
    %14 = tpu.matmul %6, %13, %cst {dimension_numbers = #tpu.dot_dimension_numbers<[1], [0], [0], [1], [0, 0, 1, 1], [], []>} : vector<16x32xbf16>, vector<32x16xbf16>, vector<16x16xf32> -> vector<16x16xf32>
    %c0_5 = arith.constant 0 : index
    %c0_6 = arith.constant 0 : index
    %15 = vector.load %arg3[%c0_5, %c0_6] : memref<32x128xbf16, #tpu.memory_space<vmem>>, vector<32x128xbf16>
    %cst_7 = arith.constant dense<0.000000e+00> : vector<16x128xf32>
    %16 = tpu.matmul %6, %15, %cst_7 {dimension_numbers = #tpu.dot_dimension_numbers<[1], [0], [0], [1], [0, 0, 1, 1], [], []>} : vector<16x32xbf16>, vector<32x128xbf16>, vector<16x128xf32> -> vector<16x128xf32>
    %c0_8 = arith.constant 0 : index
    %c0_9 = arith.constant 0 : index
    %17 = vector.load %arg4[%c0_8, %c0_9] : memref<32x128xbf16, #tpu.memory_space<vmem>>, vector<32x128xbf16>
    %cst_10 = arith.constant dense<0.000000e+00> : vector<16x128xf32>
    %18 = tpu.matmul %12, %17, %cst_10 {dimension_numbers = #tpu.dot_dimension_numbers<[1], [0], [0], [1], [0, 0, 1, 1], [], []>} : vector<16x32xbf16>, vector<32x128xbf16>, vector<16x128xf32> -> vector<16x128xf32>
    %19 = arith.addf %16, %18 : vector<16x128xf32>
    %c0_11 = arith.constant 0 : index
    %c0_12 = arith.constant 0 : index
    %20 = vector.load %arg6[%c0_11, %c0_12] : memref<1x128xf32, #tpu.memory_space<vmem>>, vector<1x128xf32>
    %21 = vector.broadcast %20 : vector<1x128xf32> to vector<16x128xf32>
    %22 = arith.addf %19, %21 : vector<16x128xf32>
    %23 = vector.extract_strided_slice %14 {offsets = [0, 0], sizes = [2, 16], strides = [1, 1]} : vector<16x16xf32> to vector<2x16xf32>
    %24 = vector.extract_strided_slice %14 {offsets = [2, 0], sizes = [2, 16], strides = [1, 1]} : vector<16x16xf32> to vector<2x16xf32>
    %25 = arith.maximumf %23, %24 : vector<2x16xf32>
    %26 = vector.extract_strided_slice %14 {offsets = [4, 0], sizes = [2, 16], strides = [1, 1]} : vector<16x16xf32> to vector<2x16xf32>
    %27 = arith.maximumf %25, %26 : vector<2x16xf32>
    %28 = vector.extract_strided_slice %14 {offsets = [6, 0], sizes = [2, 16], strides = [1, 1]} : vector<16x16xf32> to vector<2x16xf32>
    %29 = arith.maximumf %27, %28 : vector<2x16xf32>
    %30 = vector.extract_strided_slice %14 {offsets = [8, 0], sizes = [2, 16], strides = [1, 1]} : vector<16x16xf32> to vector<2x16xf32>
    %31 = arith.maximumf %29, %30 : vector<2x16xf32>
    %32 = vector.extract_strided_slice %14 {offsets = [10, 0], sizes = [2, 16], strides = [1, 1]} : vector<16x16xf32> to vector<2x16xf32>
    %33 = arith.maximumf %31, %32 : vector<2x16xf32>
    %34 = vector.extract_strided_slice %14 {offsets = [12, 0], sizes = [2, 16], strides = [1, 1]} : vector<16x16xf32> to vector<2x16xf32>
    %35 = arith.maximumf %33, %34 : vector<2x16xf32>
    %36 = vector.extract_strided_slice %14 {offsets = [14, 0], sizes = [2, 16], strides = [1, 1]} : vector<16x16xf32> to vector<2x16xf32>
    %37 = arith.maximumf %35, %36 : vector<2x16xf32>
    %c0_13 = arith.constant 0 : index
    %c0_14 = arith.constant 0 : index
    %38 = vector.load %arg5[%c0_13, %c0_14] : memref<32x128xbf16, #tpu.memory_space<vmem>>, vector<32x128xbf16>
    %cst_15 = arith.constant 0.000000e+00 : f32
    %39 = vector.broadcast %cst_15 : f32 to vector<2x32xf32>
    %cst_16 = arith.constant 0.000000e+00 : f32
    %40 = vector.broadcast %cst_16 : f32 to vector<2x32xf32>
    %cst_17 = arith.constant 0xFF800000 : f32
    %41 = vector.broadcast %cst_17 : f32 to vector<2x32xf32>
    %42 = vector.extract_strided_slice %22 {offsets = [0, 0], sizes = [2, 128], strides = [1, 1]} : vector<16x128xf32> to vector<2x128xf32>
    %43 = arith.truncf %39 : vector<2x32xf32> to vector<2x32xbf16>
    %cst_18 = arith.constant dense<0.000000e+00> : vector<2x128xf32>
    %44 = tpu.matmul %43, %38, %cst_18 {dimension_numbers = #tpu.dot_dimension_numbers<[1], [0], [0], [1], [0, 0, 1, 1], [], []>} : vector<2x32xbf16>, vector<32x128xbf16>, vector<2x128xf32> -> vector<2x128xf32>
    %45 = arith.addf %42, %44 : vector<2x128xf32>
    %46 = vector.extract_strided_slice %45 {offsets = [0, 0], sizes = [2, 32], strides = [1, 1]} : vector<2x128xf32> to vector<2x32xf32>
    %47 = arith.negf %46 : vector<2x32xf32>
    %48 = math.exp %47 : vector<2x32xf32>
    %cst_19 = arith.constant 1.000000e+00 : f32
    %49 = vector.broadcast %cst_19 : f32 to vector<2x32xf32>
    %50 = arith.addf %49, %48 : vector<2x32xf32>
    %51 = arith.divf %49, %50 : vector<2x32xf32>
    %52 = vector.extract_strided_slice %45 {offsets = [0, 32], sizes = [2, 32], strides = [1, 1]} : vector<2x128xf32> to vector<2x32xf32>
    %53 = arith.negf %52 : vector<2x32xf32>
    %54 = math.exp %53 : vector<2x32xf32>
    %cst_20 = arith.constant 1.000000e+00 : f32
    %55 = vector.broadcast %cst_20 : f32 to vector<2x32xf32>
    %56 = arith.addf %55, %54 : vector<2x32xf32>
    %57 = arith.divf %55, %56 : vector<2x32xf32>
    %58 = vector.extract_strided_slice %45 {offsets = [0, 64], sizes = [2, 32], strides = [1, 1]} : vector<2x128xf32> to vector<2x32xf32>
    %59 = math.tanh %58 : vector<2x32xf32>
    %60 = vector.extract_strided_slice %45 {offsets = [0, 96], sizes = [2, 32], strides = [1, 1]} : vector<2x128xf32> to vector<2x32xf32>
    %61 = arith.negf %60 : vector<2x32xf32>
    %62 = math.exp %61 : vector<2x32xf32>
    %cst_21 = arith.constant 1.000000e+00 : f32
    %63 = vector.broadcast %cst_21 : f32 to vector<2x32xf32>
    %64 = arith.addf %63, %62 : vector<2x32xf32>
    %65 = arith.divf %63, %64 : vector<2x32xf32>
    %66 = arith.mulf %57, %40 : vector<2x32xf32>
    %67 = arith.mulf %51, %59 : vector<2x32xf32>
    %68 = arith.addf %66, %67 : vector<2x32xf32>
    %69 = math.tanh %68 : vector<2x32xf32>
    %70 = arith.mulf %65, %69 : vector<2x32xf32>
    %71 = arith.maximumf %41, %70 : vector<2x32xf32>
    %72 = vector.extract_strided_slice %22 {offsets = [2, 0], sizes = [2, 128], strides = [1, 1]} : vector<16x128xf32> to vector<2x128xf32>
    %73 = arith.truncf %70 : vector<2x32xf32> to vector<2x32xbf16>
    %cst_22 = arith.constant dense<0.000000e+00> : vector<2x128xf32>
    %74 = tpu.matmul %73, %38, %cst_22 {dimension_numbers = #tpu.dot_dimension_numbers<[1], [0], [0], [1], [0, 0, 1, 1], [], []>} : vector<2x32xbf16>, vector<32x128xbf16>, vector<2x128xf32> -> vector<2x128xf32>
    %75 = arith.addf %72, %74 : vector<2x128xf32>
    %76 = vector.extract_strided_slice %75 {offsets = [0, 0], sizes = [2, 32], strides = [1, 1]} : vector<2x128xf32> to vector<2x32xf32>
    %77 = arith.negf %76 : vector<2x32xf32>
    %78 = math.exp %77 : vector<2x32xf32>
    %cst_23 = arith.constant 1.000000e+00 : f32
    %79 = vector.broadcast %cst_23 : f32 to vector<2x32xf32>
    %80 = arith.addf %79, %78 : vector<2x32xf32>
    %81 = arith.divf %79, %80 : vector<2x32xf32>
    %82 = vector.extract_strided_slice %75 {offsets = [0, 32], sizes = [2, 32], strides = [1, 1]} : vector<2x128xf32> to vector<2x32xf32>
    %83 = arith.negf %82 : vector<2x32xf32>
    %84 = math.exp %83 : vector<2x32xf32>
    %cst_24 = arith.constant 1.000000e+00 : f32
    %85 = vector.broadcast %cst_24 : f32 to vector<2x32xf32>
    %86 = arith.addf %85, %84 : vector<2x32xf32>
    %87 = arith.divf %85, %86 : vector<2x32xf32>
    %88 = vector.extract_strided_slice %75 {offsets = [0, 64], sizes = [2, 32], strides = [1, 1]} : vector<2x128xf32> to vector<2x32xf32>
    %89 = math.tanh %88 : vector<2x32xf32>
    %90 = vector.extract_strided_slice %75 {offsets = [0, 96], sizes = [2, 32], strides = [1, 1]} : vector<2x128xf32> to vector<2x32xf32>
    %91 = arith.negf %90 : vector<2x32xf32>
    %92 = math.exp %91 : vector<2x32xf32>
    %cst_25 = arith.constant 1.000000e+00 : f32
    %93 = vector.broadcast %cst_25 : f32 to vector<2x32xf32>
    %94 = arith.addf %93, %92 : vector<2x32xf32>
    %95 = arith.divf %93, %94 : vector<2x32xf32>
    %96 = arith.mulf %87, %68 : vector<2x32xf32>
    %97 = arith.mulf %81, %89 : vector<2x32xf32>
    %98 = arith.addf %96, %97 : vector<2x32xf32>
    %99 = math.tanh %98 : vector<2x32xf32>
    %100 = arith.mulf %95, %99 : vector<2x32xf32>
    %101 = arith.maximumf %71, %100 : vector<2x32xf32>
    %102 = vector.extract_strided_slice %22 {offsets = [4, 0], sizes = [2, 128], strides = [1, 1]} : vector<16x128xf32> to vector<2x128xf32>
    %103 = arith.truncf %100 : vector<2x32xf32> to vector<2x32xbf16>
    %cst_26 = arith.constant dense<0.000000e+00> : vector<2x128xf32>
    %104 = tpu.matmul %103, %38, %cst_26 {dimension_numbers = #tpu.dot_dimension_numbers<[1], [0], [0], [1], [0, 0, 1, 1], [], []>} : vector<2x32xbf16>, vector<32x128xbf16>, vector<2x128xf32> -> vector<2x128xf32>
    %105 = arith.addf %102, %104 : vector<2x128xf32>
    %106 = vector.extract_strided_slice %105 {offsets = [0, 0], sizes = [2, 32], strides = [1, 1]} : vector<2x128xf32> to vector<2x32xf32>
    %107 = arith.negf %106 : vector<2x32xf32>
    %108 = math.exp %107 : vector<2x32xf32>
    %cst_27 = arith.constant 1.000000e+00 : f32
    %109 = vector.broadcast %cst_27 : f32 to vector<2x32xf32>
    %110 = arith.addf %109, %108 : vector<2x32xf32>
    %111 = arith.divf %109, %110 : vector<2x32xf32>
    %112 = vector.extract_strided_slice %105 {offsets = [0, 32], sizes = [2, 32], strides = [1, 1]} : vector<2x128xf32> to vector<2x32xf32>
    %113 = arith.negf %112 : vector<2x32xf32>
    %114 = math.exp %113 : vector<2x32xf32>
    %cst_28 = arith.constant 1.000000e+00 : f32
    %115 = vector.broadcast %cst_28 : f32 to vector<2x32xf32>
    %116 = arith.addf %115, %114 : vector<2x32xf32>
    %117 = arith.divf %115, %116 : vector<2x32xf32>
    %118 = vector.extract_strided_slice %105 {offsets = [0, 64], sizes = [2, 32], strides = [1, 1]} : vector<2x128xf32> to vector<2x32xf32>
    %119 = math.tanh %118 : vector<2x32xf32>
    %120 = vector.extract_strided_slice %105 {offsets = [0, 96], sizes = [2, 32], strides = [1, 1]} : vector<2x128xf32> to vector<2x32xf32>
    %121 = arith.negf %120 : vector<2x32xf32>
    %122 = math.exp %121 : vector<2x32xf32>
    %cst_29 = arith.constant 1.000000e+00 : f32
    %123 = vector.broadcast %cst_29 : f32 to vector<2x32xf32>
    %124 = arith.addf %123, %122 : vector<2x32xf32>
    %125 = arith.divf %123, %124 : vector<2x32xf32>
    %126 = arith.mulf %117, %98 : vector<2x32xf32>
    %127 = arith.mulf %111, %119 : vector<2x32xf32>
    %128 = arith.addf %126, %127 : vector<2x32xf32>
    %129 = math.tanh %128 : vector<2x32xf32>
    %130 = arith.mulf %125, %129 : vector<2x32xf32>
    %131 = arith.maximumf %101, %130 : vector<2x32xf32>
    %132 = vector.extract_strided_slice %22 {offsets = [6, 0], sizes = [2, 128], strides = [1, 1]} : vector<16x128xf32> to vector<2x128xf32>
    %133 = arith.truncf %130 : vector<2x32xf32> to vector<2x32xbf16>
    %cst_30 = arith.constant dense<0.000000e+00> : vector<2x128xf32>
    %134 = tpu.matmul %133, %38, %cst_30 {dimension_numbers = #tpu.dot_dimension_numbers<[1], [0], [0], [1], [0, 0, 1, 1], [], []>} : vector<2x32xbf16>, vector<32x128xbf16>, vector<2x128xf32> -> vector<2x128xf32>
    %135 = arith.addf %132, %134 : vector<2x128xf32>
    %136 = vector.extract_strided_slice %135 {offsets = [0, 0], sizes = [2, 32], strides = [1, 1]} : vector<2x128xf32> to vector<2x32xf32>
    %137 = arith.negf %136 : vector<2x32xf32>
    %138 = math.exp %137 : vector<2x32xf32>
    %cst_31 = arith.constant 1.000000e+00 : f32
    %139 = vector.broadcast %cst_31 : f32 to vector<2x32xf32>
    %140 = arith.addf %139, %138 : vector<2x32xf32>
    %141 = arith.divf %139, %140 : vector<2x32xf32>
    %142 = vector.extract_strided_slice %135 {offsets = [0, 32], sizes = [2, 32], strides = [1, 1]} : vector<2x128xf32> to vector<2x32xf32>
    %143 = arith.negf %142 : vector<2x32xf32>
    %144 = math.exp %143 : vector<2x32xf32>
    %cst_32 = arith.constant 1.000000e+00 : f32
    %145 = vector.broadcast %cst_32 : f32 to vector<2x32xf32>
    %146 = arith.addf %145, %144 : vector<2x32xf32>
    %147 = arith.divf %145, %146 : vector<2x32xf32>
    %148 = vector.extract_strided_slice %135 {offsets = [0, 64], sizes = [2, 32], strides = [1, 1]} : vector<2x128xf32> to vector<2x32xf32>
    %149 = math.tanh %148 : vector<2x32xf32>
    %150 = vector.extract_strided_slice %135 {offsets = [0, 96], sizes = [2, 32], strides = [1, 1]} : vector<2x128xf32> to vector<2x32xf32>
    %151 = arith.negf %150 : vector<2x32xf32>
    %152 = math.exp %151 : vector<2x32xf32>
    %cst_33 = arith.constant 1.000000e+00 : f32
    %153 = vector.broadcast %cst_33 : f32 to vector<2x32xf32>
    %154 = arith.addf %153, %152 : vector<2x32xf32>
    %155 = arith.divf %153, %154 : vector<2x32xf32>
    %156 = arith.mulf %147, %128 : vector<2x32xf32>
    %157 = arith.mulf %141, %149 : vector<2x32xf32>
    %158 = arith.addf %156, %157 : vector<2x32xf32>
    %159 = math.tanh %158 : vector<2x32xf32>
    %160 = arith.mulf %155, %159 : vector<2x32xf32>
    %161 = arith.maximumf %131, %160 : vector<2x32xf32>
    %162 = vector.extract_strided_slice %22 {offsets = [8, 0], sizes = [2, 128], strides = [1, 1]} : vector<16x128xf32> to vector<2x128xf32>
    %163 = arith.truncf %160 : vector<2x32xf32> to vector<2x32xbf16>
    %cst_34 = arith.constant dense<0.000000e+00> : vector<2x128xf32>
    %164 = tpu.matmul %163, %38, %cst_34 {dimension_numbers = #tpu.dot_dimension_numbers<[1], [0], [0], [1], [0, 0, 1, 1], [], []>} : vector<2x32xbf16>, vector<32x128xbf16>, vector<2x128xf32> -> vector<2x128xf32>
    %165 = arith.addf %162, %164 : vector<2x128xf32>
    %166 = vector.extract_strided_slice %165 {offsets = [0, 0], sizes = [2, 32], strides = [1, 1]} : vector<2x128xf32> to vector<2x32xf32>
    %167 = arith.negf %166 : vector<2x32xf32>
    %168 = math.exp %167 : vector<2x32xf32>
    %cst_35 = arith.constant 1.000000e+00 : f32
    %169 = vector.broadcast %cst_35 : f32 to vector<2x32xf32>
    %170 = arith.addf %169, %168 : vector<2x32xf32>
    %171 = arith.divf %169, %170 : vector<2x32xf32>
    %172 = vector.extract_strided_slice %165 {offsets = [0, 32], sizes = [2, 32], strides = [1, 1]} : vector<2x128xf32> to vector<2x32xf32>
    %173 = arith.negf %172 : vector<2x32xf32>
    %174 = math.exp %173 : vector<2x32xf32>
    %cst_36 = arith.constant 1.000000e+00 : f32
    %175 = vector.broadcast %cst_36 : f32 to vector<2x32xf32>
    %176 = arith.addf %175, %174 : vector<2x32xf32>
    %177 = arith.divf %175, %176 : vector<2x32xf32>
    %178 = vector.extract_strided_slice %165 {offsets = [0, 64], sizes = [2, 32], strides = [1, 1]} : vector<2x128xf32> to vector<2x32xf32>
    %179 = math.tanh %178 : vector<2x32xf32>
    %180 = vector.extract_strided_slice %165 {offsets = [0, 96], sizes = [2, 32], strides = [1, 1]} : vector<2x128xf32> to vector<2x32xf32>
    %181 = arith.negf %180 : vector<2x32xf32>
    %182 = math.exp %181 : vector<2x32xf32>
    %cst_37 = arith.constant 1.000000e+00 : f32
    %183 = vector.broadcast %cst_37 : f32 to vector<2x32xf32>
    %184 = arith.addf %183, %182 : vector<2x32xf32>
    %185 = arith.divf %183, %184 : vector<2x32xf32>
    %186 = arith.mulf %177, %158 : vector<2x32xf32>
    %187 = arith.mulf %171, %179 : vector<2x32xf32>
    %188 = arith.addf %186, %187 : vector<2x32xf32>
    %189 = math.tanh %188 : vector<2x32xf32>
    %190 = arith.mulf %185, %189 : vector<2x32xf32>
    %191 = arith.maximumf %161, %190 : vector<2x32xf32>
    %192 = vector.extract_strided_slice %22 {offsets = [10, 0], sizes = [2, 128], strides = [1, 1]} : vector<16x128xf32> to vector<2x128xf32>
    %193 = arith.truncf %190 : vector<2x32xf32> to vector<2x32xbf16>
    %cst_38 = arith.constant dense<0.000000e+00> : vector<2x128xf32>
    %194 = tpu.matmul %193, %38, %cst_38 {dimension_numbers = #tpu.dot_dimension_numbers<[1], [0], [0], [1], [0, 0, 1, 1], [], []>} : vector<2x32xbf16>, vector<32x128xbf16>, vector<2x128xf32> -> vector<2x128xf32>
    %195 = arith.addf %192, %194 : vector<2x128xf32>
    %196 = vector.extract_strided_slice %195 {offsets = [0, 0], sizes = [2, 32], strides = [1, 1]} : vector<2x128xf32> to vector<2x32xf32>
    %197 = arith.negf %196 : vector<2x32xf32>
    %198 = math.exp %197 : vector<2x32xf32>
    %cst_39 = arith.constant 1.000000e+00 : f32
    %199 = vector.broadcast %cst_39 : f32 to vector<2x32xf32>
    %200 = arith.addf %199, %198 : vector<2x32xf32>
    %201 = arith.divf %199, %200 : vector<2x32xf32>
    %202 = vector.extract_strided_slice %195 {offsets = [0, 32], sizes = [2, 32], strides = [1, 1]} : vector<2x128xf32> to vector<2x32xf32>
    %203 = arith.negf %202 : vector<2x32xf32>
    %204 = math.exp %203 : vector<2x32xf32>
    %cst_40 = arith.constant 1.000000e+00 : f32
    %205 = vector.broadcast %cst_40 : f32 to vector<2x32xf32>
    %206 = arith.addf %205, %204 : vector<2x32xf32>
    %207 = arith.divf %205, %206 : vector<2x32xf32>
    %208 = vector.extract_strided_slice %195 {offsets = [0, 64], sizes = [2, 32], strides = [1, 1]} : vector<2x128xf32> to vector<2x32xf32>
    %209 = math.tanh %208 : vector<2x32xf32>
    %210 = vector.extract_strided_slice %195 {offsets = [0, 96], sizes = [2, 32], strides = [1, 1]} : vector<2x128xf32> to vector<2x32xf32>
    %211 = arith.negf %210 : vector<2x32xf32>
    %212 = math.exp %211 : vector<2x32xf32>
    %cst_41 = arith.constant 1.000000e+00 : f32
    %213 = vector.broadcast %cst_41 : f32 to vector<2x32xf32>
    %214 = arith.addf %213, %212 : vector<2x32xf32>
    %215 = arith.divf %213, %214 : vector<2x32xf32>
    %216 = arith.mulf %207, %188 : vector<2x32xf32>
    %217 = arith.mulf %201, %209 : vector<2x32xf32>
    %218 = arith.addf %216, %217 : vector<2x32xf32>
    %219 = math.tanh %218 : vector<2x32xf32>
    %220 = arith.mulf %215, %219 : vector<2x32xf32>
    %221 = arith.maximumf %191, %220 : vector<2x32xf32>
    %222 = vector.extract_strided_slice %22 {offsets = [12, 0], sizes = [2, 128], strides = [1, 1]} : vector<16x128xf32> to vector<2x128xf32>
    %223 = arith.truncf %220 : vector<2x32xf32> to vector<2x32xbf16>
    %cst_42 = arith.constant dense<0.000000e+00> : vector<2x128xf32>
    %224 = tpu.matmul %223, %38, %cst_42 {dimension_numbers = #tpu.dot_dimension_numbers<[1], [0], [0], [1], [0, 0, 1, 1], [], []>} : vector<2x32xbf16>, vector<32x128xbf16>, vector<2x128xf32> -> vector<2x128xf32>
    %225 = arith.addf %222, %224 : vector<2x128xf32>
    %226 = vector.extract_strided_slice %225 {offsets = [0, 0], sizes = [2, 32], strides = [1, 1]} : vector<2x128xf32> to vector<2x32xf32>
    %227 = arith.negf %226 : vector<2x32xf32>
    %228 = math.exp %227 : vector<2x32xf32>
    %cst_43 = arith.constant 1.000000e+00 : f32
    %229 = vector.broadcast %cst_43 : f32 to vector<2x32xf32>
    %230 = arith.addf %229, %228 : vector<2x32xf32>
    %231 = arith.divf %229, %230 : vector<2x32xf32>
    %232 = vector.extract_strided_slice %225 {offsets = [0, 32], sizes = [2, 32], strides = [1, 1]} : vector<2x128xf32> to vector<2x32xf32>
    %233 = arith.negf %232 : vector<2x32xf32>
    %234 = math.exp %233 : vector<2x32xf32>
    %cst_44 = arith.constant 1.000000e+00 : f32
    %235 = vector.broadcast %cst_44 : f32 to vector<2x32xf32>
    %236 = arith.addf %235, %234 : vector<2x32xf32>
    %237 = arith.divf %235, %236 : vector<2x32xf32>
    %238 = vector.extract_strided_slice %225 {offsets = [0, 64], sizes = [2, 32], strides = [1, 1]} : vector<2x128xf32> to vector<2x32xf32>
    %239 = math.tanh %238 : vector<2x32xf32>
    %240 = vector.extract_strided_slice %225 {offsets = [0, 96], sizes = [2, 32], strides = [1, 1]} : vector<2x128xf32> to vector<2x32xf32>
    %241 = arith.negf %240 : vector<2x32xf32>
    %242 = math.exp %241 : vector<2x32xf32>
    %cst_45 = arith.constant 1.000000e+00 : f32
    %243 = vector.broadcast %cst_45 : f32 to vector<2x32xf32>
    %244 = arith.addf %243, %242 : vector<2x32xf32>
    %245 = arith.divf %243, %244 : vector<2x32xf32>
    %246 = arith.mulf %237, %218 : vector<2x32xf32>
    %247 = arith.mulf %231, %239 : vector<2x32xf32>
    %248 = arith.addf %246, %247 : vector<2x32xf32>
    %249 = math.tanh %248 : vector<2x32xf32>
    %250 = arith.mulf %245, %249 : vector<2x32xf32>
    %251 = arith.maximumf %221, %250 : vector<2x32xf32>
    %252 = vector.extract_strided_slice %22 {offsets = [14, 0], sizes = [2, 128], strides = [1, 1]} : vector<16x128xf32> to vector<2x128xf32>
    %253 = arith.truncf %250 : vector<2x32xf32> to vector<2x32xbf16>
    %cst_46 = arith.constant dense<0.000000e+00> : vector<2x128xf32>
    %254 = tpu.matmul %253, %38, %cst_46 {dimension_numbers = #tpu.dot_dimension_numbers<[1], [0], [0], [1], [0, 0, 1, 1], [], []>} : vector<2x32xbf16>, vector<32x128xbf16>, vector<2x128xf32> -> vector<2x128xf32>
    %255 = arith.addf %252, %254 : vector<2x128xf32>
    %256 = vector.extract_strided_slice %255 {offsets = [0, 0], sizes = [2, 32], strides = [1, 1]} : vector<2x128xf32> to vector<2x32xf32>
    %257 = arith.negf %256 : vector<2x32xf32>
    %258 = math.exp %257 : vector<2x32xf32>
    %cst_47 = arith.constant 1.000000e+00 : f32
    %259 = vector.broadcast %cst_47 : f32 to vector<2x32xf32>
    %260 = arith.addf %259, %258 : vector<2x32xf32>
    %261 = arith.divf %259, %260 : vector<2x32xf32>
    %262 = vector.extract_strided_slice %255 {offsets = [0, 32], sizes = [2, 32], strides = [1, 1]} : vector<2x128xf32> to vector<2x32xf32>
    %263 = arith.negf %262 : vector<2x32xf32>
    %264 = math.exp %263 : vector<2x32xf32>
    %cst_48 = arith.constant 1.000000e+00 : f32
    %265 = vector.broadcast %cst_48 : f32 to vector<2x32xf32>
    %266 = arith.addf %265, %264 : vector<2x32xf32>
    %267 = arith.divf %265, %266 : vector<2x32xf32>
    %268 = vector.extract_strided_slice %255 {offsets = [0, 64], sizes = [2, 32], strides = [1, 1]} : vector<2x128xf32> to vector<2x32xf32>
    %269 = math.tanh %268 : vector<2x32xf32>
    %270 = vector.extract_strided_slice %255 {offsets = [0, 96], sizes = [2, 32], strides = [1, 1]} : vector<2x128xf32> to vector<2x32xf32>
    %271 = arith.negf %270 : vector<2x32xf32>
    %272 = math.exp %271 : vector<2x32xf32>
    %cst_49 = arith.constant 1.000000e+00 : f32
    %273 = vector.broadcast %cst_49 : f32 to vector<2x32xf32>
    %274 = arith.addf %273, %272 : vector<2x32xf32>
    %275 = arith.divf %273, %274 : vector<2x32xf32>
    %276 = arith.mulf %267, %248 : vector<2x32xf32>
    %277 = arith.mulf %261, %269 : vector<2x32xf32>
    %278 = arith.addf %276, %277 : vector<2x32xf32>
    %279 = math.tanh %278 : vector<2x32xf32>
    %280 = arith.mulf %275, %279 : vector<2x32xf32>
    %281 = arith.maximumf %251, %280 : vector<2x32xf32>
    %cst_50 = arith.constant 0.000000e+00 : f32
    %282 = vector.broadcast %cst_50 : f32 to vector<2x16xf32>
    %283 = arith.maximumf %37, %282 : vector<2x16xf32>
    %284 = arith.truncf %283 : vector<2x16xf32> to vector<2x16xbf16>
    %cst_51 = arith.constant 0.000000e+00 : f32
    %285 = vector.broadcast %cst_51 : f32 to vector<2x32xf32>
    %286 = arith.maximumf %281, %285 : vector<2x32xf32>
    %287 = arith.truncf %286 : vector<2x32xf32> to vector<2x32xbf16>
    %c0_52 = arith.constant 0 : index
    %c0_53 = arith.constant 0 : index
    %288 = vector.load %arg7[%c0_52, %c0_53] : memref<16x128xbf16, #tpu.memory_space<vmem>>, vector<16x128xbf16>
    %cst_54 = arith.constant dense<0.000000e+00> : vector<2x128xf32>
    %289 = tpu.matmul %284, %288, %cst_54 {dimension_numbers = #tpu.dot_dimension_numbers<[1], [0], [0], [1], [0, 0, 1, 1], [], []>} : vector<2x16xbf16>, vector<16x128xbf16>, vector<2x128xf32> -> vector<2x128xf32>
    %c0_55 = arith.constant 0 : index
    %c0_56 = arith.constant 0 : index
    %290 = vector.load %arg8[%c0_55, %c0_56] : memref<32x128xbf16, #tpu.memory_space<vmem>>, vector<32x128xbf16>
    %cst_57 = arith.constant dense<0.000000e+00> : vector<2x128xf32>
    %291 = tpu.matmul %287, %290, %cst_57 {dimension_numbers = #tpu.dot_dimension_numbers<[1], [0], [0], [1], [0, 0, 1, 1], [], []>} : vector<2x32xbf16>, vector<32x128xbf16>, vector<2x128xf32> -> vector<2x128xf32>
    %292 = arith.addf %289, %291 : vector<2x128xf32>
    %c0_58 = arith.constant 0 : index
    %c0_59 = arith.constant 0 : index
    %293 = vector.load %arg9[%c0_58, %c0_59] : memref<1x128xf32, #tpu.memory_space<vmem>>, vector<1x128xf32>
    %294 = vector.broadcast %293 : vector<1x128xf32> to vector<2x128xf32>
    %295 = arith.addf %292, %294 : vector<2x128xf32>
    %c0_60 = arith.constant 0 : index
    %c0_61 = arith.constant 0 : index
    %296 = vector.load %arg10[%c0_60, %c0_61] : memref<2x128xf32, #tpu.memory_space<vmem>>, vector<2x128xf32>
    tpu.vector_store %arg10[%c0_60, %c0_61], %295 {strides = array<i32>} : memref<2x128xf32, #tpu.memory_space<vmem>>, vector<2x128xf32>,
    return
  }
}

</mosaic_0001>

<llo_original>
// kernel: textrcnn_forward.1
$region0: #{textrcnn_forward.1}
  #allocation0 [shape = 'u32[]', space=smem, size = 0x4, offset = 0x4, fixed_abs, tag = 'smem constant byte address 0x4 - core index']
  #allocation1 [shape = 'u32[144,128]{1,0:T(1,128)}', space=vmem, size = 0x12000, scoped, tag = 'internal scratch']
  %s0 = inlined_call_operand.vmem [shape: s32[16,1], index: 0, kind: input, shape index: {}]
  %s1 = inlined_call_operand.vmem [shape: s32[16,1], index: 1, kind: input, shape index: {}]
  %s2 = inlined_call_operand.vmem [shape: bf16[32,16], index: 2, kind: input, shape index: {}]
  %s3 = inlined_call_operand.vmem [shape: bf16[32,128], index: 3, kind: input, shape index: {}]
  %s4 = inlined_call_operand.vmem [shape: bf16[32,128], index: 4, kind: input, shape index: {}]
  %s5 = inlined_call_operand.vmem [shape: bf16[32,128], index: 5, kind: input, shape index: {}]
  %s6 = inlined_call_operand.vmem [shape: f32[1,128], index: 6, kind: input, shape index: {}]
  %s7 = inlined_call_operand.vmem [shape: bf16[16,128], index: 7, kind: input, shape index: {}]
  %s8 = inlined_call_operand.vmem [shape: bf16[32,128], index: 8, kind: input, shape index: {}]
  %s9 = inlined_call_operand.vmem [shape: f32[1,128], index: 9, kind: input, shape index: {}]
  %s10 = inlined_call_operand.hbm [shape: f32[2,128], index: 10, kind: output, shape index: {}]
  %s11 = sld [smem:[#allocation0]]
  $region50: #{textrcnn_forward.1} parent=0
    _
  %s13 = ssub.s32 1, %s11
  %s14 = scalar_select 0, %s13, %s11
  $region1: #{textrcnn_forward.1} parent=0
    #allocation2 [shape = 'u8[1024]{0}', space=vmem, size = 0x400, scoped, tag = 'output window, operand 0, single buffered']
    #allocation3 [shape = 's32[1]{0}', space=sflag, size = 0x4, scoped, tag = 'scoped memory for textrcnn_forward.1']
    %15 = vsyncpa [#allocation3], 0
    // Predicated region
    $region2: #{textrcnn_forward.1} parent=1 // pred_check
      _
    $region3: #{textrcnn_forward.1} parent=1 // pred_check_branch
      %17 = sbr.rel (0) target = $region5
    $region4: #{textrcnn_forward.1} parent=1 // pred_region
      _
    $region5: #{textrcnn_forward.1} parent=1 // pred_fallthru
      _
    // Predicated region
    $region6: #{textrcnn_forward.1} parent=1 // pred_check
      _
    $region7: #{textrcnn_forward.1} parent=1 // pred_check_branch
      %19 = sbr.rel (0) target = $region9
    $region8: #{textrcnn_forward.1} parent=1 // pred_region
      _
    $region9: #{textrcnn_forward.1} parent=1 // pred_fallthru
      _
    // Predicated region
    $region10: #{textrcnn_forward.1} parent=1 // pred_check
      _
    $region11: #{textrcnn_forward.1} parent=1 // pred_check_branch
      %21 = sbr.rel (0) target = $region13
    $region12: #{textrcnn_forward.1} parent=1 // pred_region
      _
    $region13: #{textrcnn_forward.1} parent=1 // pred_fallthru
      _
    // Predicated region
    $region14: #{textrcnn_forward.1} parent=1 // pred_check
      _
    $region15: #{textrcnn_forward.1} parent=1 // pred_check_branch
      %23 = sbr.rel (0) target = $region17
    $region16: #{textrcnn_forward.1} parent=1 // pred_region
      _
    $region17: #{textrcnn_forward.1} parent=1 // pred_fallthru
      _
    // Predicated region
    $region18: #{textrcnn_forward.1} parent=1 // pred_check
      _
    $region19: #{textrcnn_forward.1} parent=1 // pred_check_branch
      %25 = sbr.rel (0) target = $region21
    $region20: #{textrcnn_forward.1} parent=1 // pred_region
      _
    $region21: #{textrcnn_forward.1} parent=1 // pred_fallthru
      _
    // Predicated region
    $region22: #{textrcnn_forward.1} parent=1 // pred_check
      _
    $region23: #{textrcnn_forward.1} parent=1 // pred_check_branch
      %27 = sbr.rel (0) target = $region25
    $region24: #{textrcnn_forward.1} parent=1 // pred_region
      _
    $region25: #{textrcnn_forward.1} parent=1 // pred_fallthru
      _
    // Predicated region
    $region26: #{textrcnn_forward.1} parent=1 // pred_check
      _
    $region27: #{textrcnn_forward.1} parent=1 // pred_check_branch
      %29 = sbr.rel (0) target = $region29
    $region28: #{textrcnn_forward.1} parent=1 // pred_region
      _
    $region29: #{textrcnn_forward.1} parent=1 // pred_fallthru
      _
    // Predicated region
    $region30: #{textrcnn_forward.1} parent=1 // pred_check
      _
    $region31: #{textrcnn_forward.1} parent=1 // pred_check_branch
      %31 = sbr.rel (0) target = $region33
    $region32: #{textrcnn_forward.1} parent=1 // pred_region
      _
    $region33: #{textrcnn_forward.1} parent=1 // pred_fallthru
      _
    // Predicated region
    $region34: #{textrcnn_forward.1} parent=1 // pred_check
      _
    $region35: #{textrcnn_forward.1} parent=1 // pred_check_branch
      %33 = sbr.rel (0) target = $region37
    $region36: #{textrcnn_forward.1} parent=1 // pred_region
      _
    $region37: #{textrcnn_forward.1} parent=1 // pred_fallthru
      _
    // Predicated region
    $region38: #{textrcnn_forward.1} parent=1 // pred_check
      _
    $region39: #{textrcnn_forward.1} parent=1 // pred_check_branch
      %35 = sbr.rel (0) target = $region41
    $region40: #{textrcnn_forward.1} parent=1 // pred_region
      _
    $region41: #{textrcnn_forward.1} parent=1 // pred_fallthru
      _
    %v37 = vlaneseq
    %v38 = vand.u32 %v37, 127
    %v39 = vld [vmem:[%s0] sm:$0xff]
    %v40 = vld [vmem:[%s0 + $0x8] sm:$0xff]
    %41 = vset.pattern.permute.xlu0 0
    %42 = vperm.xlu0 %41, %v39
    %v43 = vpop.permute.xlu0 %42
    %44 = vset.pattern.permute.xlu0 0
    %45 = vperm.xlu0 %44, %v40
    %v46 = vpop.permute.xlu0 %45
    %vm47 = vcmp.eq.s32.totalorder %v38, %v43
    %vm48 = vcmp.eq.s32.totalorder %v38, %v46
    %v49 = vsel %vm47, 1, 0
    %v50 = vsel %vm48, 1, 0
    %v51 = vcvt.s32.f32 %v49
    %v52 = vcvt.s32.f32 %v50
    %v53 = vpack.c.bf16 %v52, %v51
    %v54 = vld [vmem:[%s1] sm:$0xff]
    %v55 = vld [vmem:[%s1 + $0x8] sm:$0xff]
    %56 = vset.pattern.permute.xlu0 0
    %57 = vperm.xlu0 %56, %v54
    %v58 = vpop.permute.xlu0 %57
    %59 = vset.pattern.permute.xlu0 0
    %60 = vperm.xlu0 %59, %v55
    %v61 = vpop.permute.xlu0 %60
    %vm62 = vcmp.eq.s32.totalorder %v38, %v58
    %vm63 = vcmp.eq.s32.totalorder %v38, %v61
    %v64 = vsel %vm62, 1, 0
    %v65 = vsel %vm63, 1, 0
    %v66 = vcvt.s32.f32 %v64
    %v67 = vcvt.s32.f32 %v65
    %v68 = vpack.c.bf16 %v67, %v66
    %v69 = vld [vmem:[%s2] sm:$0xf]
    %v70 = vld [vmem:[%s2 + $0x4] sm:$0xf]
    %v71 = vld [vmem:[%s2 + $0x8] sm:$0xf]
    %v72 = vld [vmem:[%s2 + $0xc] sm:$0xf]
    %v77 = vunpack.c.l.b16 %v69
    %v78 = vunpack.c.l.b16 %v70
    %v79 = vunpack.c.l.b16 %v71
    %v80 = vunpack.c.l.b16 %v72
    %v81 = vpack.c.b16 %v78, %v77
    %v82 = vpack.c.b16 %v80, %v79
    %vm85 = vcmask 261120
    %v87 = vsel %vm85, %v53, 0
    %89 = vmatprep.subr.bf16.mxu0 0
    %90 = vmatpush1.bf16.msra.mxu0 0
    %91 = vmatprep.subr.bf16.mxu0 0
    %92 = vmatpush1.bf16.msra.mxu0 0
    %93 = vmatprep.subr.bf16.mxu0 0
    %94 = vmatpush1.bf16.msra.mxu0 0
    %95 = vmatprep.subr.bf16.mxu0 0
    %96 = vmatpush1.bf16.msra.mxu0 0
    %97 = vmatprep.subr.bf16.mxu0 0
    %98 = vmatpush1.bf16.msra.mxu0 0
    %99 = vmatprep.subr.bf16.mxu0 0
    %100 = vmatpush1.bf16.msra.mxu0 0
    %101 = vmatprep.subr.bf16.mxu0 0
    %102 = vmatpush1.bf16.msra.mxu0 %v82
    %103 = vmatprep.subr.bf16.mxu0 0
    %104 = vmatpush1.bf16.msra.mxu0 %v81
    %105 = vmatprep.subr.bf16.mxu0 0
    %106 = vmatpush2.bf16.msra.mxu0 0
    %107 = vmatprep.subr.bf16.mxu0 0
    %108 = vmatpush2.bf16.msra.mxu0 0
    %109 = vmatprep.subr.bf16.mxu0 0
    %110 = vmatpush2.bf16.msra.mxu0 0
    %111 = vmatprep.subr.bf16.mxu0 0
    %112 = vmatpush2.bf16.msra.mxu0 0
    %113 = vmatprep.subr.bf16.mxu0 0
    %114 = vmatpush2.bf16.msra.mxu0 0
    %115 = vmatprep.subr.bf16.mxu0 0
    %116 = vmatpush2.bf16.msra.mxu0 0
    %117 = vmatprep.subr.bf16.mxu0 0
    %118 = vmatpush2.bf16.msra.mxu0 0
    %119 = vmatprep.subr.bf16.mxu0 0
    %120 = vmatpush2.bf16.msra.mxu0 0
    %121 = vmatprep.mubr.bf16.mxu0 0
    %122 = vmatmul.mubr.bf16.gmra.mxu0 %v87
    %v123 = vpop.f32.mrf.mxu0
    %v124 = vadd.f32 0.0, %v123
    %v125 = vpop.f32.mrf.mxu0
    %v126 = vpop.f32.mrf.mxu0
    %v127 = vadd.f32 0.0, %v126
    %v128 = vpop.f32.mrf.mxu0
    %129 = vdwg.mxu0
    %v130 = vld [vmem:[%s3] sm:$0xf]
    %v131 = vld [vmem:[%s3 + $0x4] sm:$0xf]
    %v132 = vld [vmem:[%s3 + $0x8] sm:$0xf]
    %v133 = vld [vmem:[%s3 + $0xc] sm:$0xf]
    %v134 = vld [vmem:[%s4] sm:$0xf]
    %v135 = vld [vmem:[%s4 + $0x4] sm:$0xf]
    %v136 = vld [vmem:[%s4 + $0x8] sm:$0xf]
    %v137 = vld [vmem:[%s4 + $0xc] sm:$0xf]
    %v142 = vunpack.c.l.b16 %v134
    %v143 = vunpack.c.l.b16 %v135
    %v144 = vunpack.c.l.b16 %v136
    %v145 = vunpack.c.l.b16 %v137
    %v146 = vpack.c.b16 %v143, %v142
    %v147 = vpack.c.b16 %v145, %v144
    %v151 = vsel %vm85, %v68, 0
    %153 = vmatprep.subr.bf16.mxu0 0
    %154 = vmatpush1.bf16.msra.mxu0 0
    %155 = vmatprep.subr.bf16.mxu0 0
    %156 = vmatpush1.bf16.msra.mxu0 0
    %157 = vmatprep.subr.bf16.mxu0 0
    %158 = vmatpush1.bf16.msra.mxu0 0
    %159 = vmatprep.subr.bf16.mxu0 0
    %160 = vmatpush1.bf16.msra.mxu0 0
    %161 = vmatprep.subr.bf16.mxu0 0
    %162 = vmatpush1.bf16.msra.mxu0 0
    %163 = vmatprep.subr.bf16.mxu0 0
    %164 = vmatpush1.bf16.msra.mxu0 0
    %165 = vmatprep.subr.bf16.mxu0 0
    %166 = vmatpush1.bf16.msra.mxu0 %v147
    %167 = vmatprep.subr.bf16.mxu0 0
    %168 = vmatpush1.bf16.msra.mxu0 %v146
    %169 = vmatprep.subr.bf16.mxu0 0
    %170 = vmatpush2.bf16.msra.mxu0 0
    %171 = vmatprep.subr.bf16.mxu0 0
    %172 = vmatpush2.bf16.msra.mxu0 0
    %173 = vmatprep.subr.bf16.mxu0 0
    %174 = vmatpush2.bf16.msra.mxu0 0
    %175 = vmatprep.subr.bf16.mxu0 0
    %176 = vmatpush2.bf16.msra.mxu0 0
    %177 = vmatprep.subr.bf16.mxu0 0
    %178 = vmatpush2.bf16.msra.mxu0 0
    %179 = vmatprep.subr.bf16.mxu0 0
    %180 = vmatpush2.bf16.msra.mxu0 0
    %181 = vmatprep.subr.bf16.mxu0 0
    %182 = vmatpush2.bf16.msra.mxu0 0
    %183 = vmatprep.subr.bf16.mxu0 0
    %184 = vmatpush2.bf16.msra.mxu0 0
    %185 = vmatprep.mubr.bf16.mxu0 0
    %186 = vmatmul.mubr.bf16.gmra.mxu0 %v151
    %v187 = vpop.f32.mrf.mxu0
    %v188 = vadd.f32 0.0, %v187
    %v189 = vpop.f32.mrf.mxu0
    %v190 = vpop.f32.mrf.mxu0
    %v191 = vadd.f32 0.0, %v190
    %v192 = vpop.f32.mrf.mxu0
    %193 = vdwg.mxu0
    %v198 = vunpack.c.l.b16 %v130
    %v199 = vunpack.c.l.b16 %v131
    %v200 = vunpack.c.l.b16 %v132
    %v201 = vunpack.c.l.b16 %v133
    %v202 = vpack.c.b16 %v199, %v198
    %v203 = vpack.c.b16 %v201, %v200
    %206 = vmatprep.subr.bf16.mxu0 0
    %207 = vmatpush1.bf16.msra.mxu0 0
    %208 = vmatprep.subr.bf16.mxu0 0
    %209 = vmatpush1.bf16.msra.mxu0 0
    %210 = vmatprep.subr.bf16.mxu0 0
    %211 = vmatpush1.bf16.msra.mxu0 0
    %212 = vmatprep.subr.bf16.mxu0 0
    %213 = vmatpush1.bf16.msra.mxu0 0
    %214 = vmatprep.subr.bf16.mxu0 0
    %215 = vmatpush1.bf16.msra.mxu0 0
    %216 = vmatprep.subr.bf16.mxu0 0
    %217 = vmatpush1.bf16.msra.mxu0 0
    %218 = vmatprep.subr.bf16.mxu0 0
    %219 = vmatpush1.bf16.msra.mxu0 %v203
    %220 = vmatprep.subr.bf16.mxu0 0
    %221 = vmatpush1.bf16.msra.mxu0 %v202
    %222 = vmatprep.subr.bf16.mxu0 0
    %223 = vmatpush2.bf16.msra.mxu0 0
    %224 = vmatprep.subr.bf16.mxu0 0
    %225 = vmatpush2.bf16.msra.mxu0 0
    %226 = vmatprep.subr.bf16.mxu0 0
    %227 = vmatpush2.bf16.msra.mxu0 0
    %228 = vmatprep.subr.bf16.mxu0 0
    %229 = vmatpush2.bf16.msra.mxu0 0
    %230 = vmatprep.subr.bf16.mxu0 0
    %231 = vmatpush2.bf16.msra.mxu0 0
    %232 = vmatprep.subr.bf16.mxu0 0
    %233 = vmatpush2.bf16.msra.mxu0 0
    %234 = vmatprep.subr.bf16.mxu0 0
    %235 = vmatpush2.bf16.msra.mxu0 0
    %236 = vmatprep.subr.bf16.mxu0 0
    %237 = vmatpush2.bf16.msra.mxu0 0
    %238 = vmatprep.mubr.bf16.mxu0 0
    %239 = vmatmul.mubr.bf16.gmra.mxu0 %v87
    %v240 = vpop.f32.mrf.mxu0
    %v241 = vadd.f32 %v188, %v240
    %v242 = vpop.f32.mrf.mxu0
    %v243 = vpop.f32.mrf.mxu0
    %v244 = vadd.f32 %v191, %v243
    %v245 = vpop.f32.mrf.mxu0
    %246 = vdwg.mxu0
    %v247 = vld [vmem:[%s6] sm:$0x1]
    %v249 = vlaneseq
    %v250 = vshrl.u32 %v249, 7
    %v251 = vsub.s32 0, %v250
    %v252 = vrot.slane %v247, %v251
    %v254 = vadd.f32 %v241, %v252
    %v255 = vadd.f32 %v244, %v252
    %v257 = vrot.slane %v124, 2
    %v259 = vmax.f32 %v124, %v257
    %v260 = vrot.slane %v124, 4
    %v262 = vmax.f32 %v259, %v260
    %v263 = vrot.slane %v124, 6
    %v265 = vmax.f32 %v262, %v263
    %v266 = vmax.f32 %v265, %v127
    %v268 = vrot.slane %v127, 2
    %v270 = vmax.f32 %v266, %v268
    %v271 = vrot.slane %v127, 4
    %v273 = vmax.f32 %v270, %v271
    %v274 = vrot.slane %v127, 6
    %v276 = vmax.f32 %v273, %v274
    %v277 = vld [vmem:[%s5] sm:$0xf]
    %v278 = vld [vmem:[%s5 + $0x4] sm:$0xf]
    %v279 = vld [vmem:[%s5 + $0x8] sm:$0xf]
    %v280 = vld [vmem:[%s5 + $0xc] sm:$0xf]
    %v285 = vunpack.c.l.b16 %v277
    %v286 = vunpack.c.l.b16 %v278
    %v287 = vunpack.c.l.b16 %v279
    %v288 = vunpack.c.l.b16 %v280
    %v289 = vpack.c.b16 %v286, %v285
    %v290 = vpack.c.b16 %v288, %v287
    %v294 = vsel %vm85, 0, 0
    %296 = vmatprep.subr.bf16.mxu0 0
    %297 = vmatpush1.bf16.msra.mxu0 0
    %298 = vmatprep.subr.bf16.mxu0 0
    %299 = vmatpush1.bf16.msra.mxu0 0
    %300 = vmatprep.subr.bf16.mxu0 0
    %301 = vmatpush1.bf16.msra.mxu0 0
    %302 = vmatprep.subr.bf16.mxu0 0
    %303 = vmatpush1.bf16.msra.mxu0 0
    %304 = vmatprep.subr.bf16.mxu0 0
    %305 = vmatpush1.bf16.msra.mxu0 0
    %306 = vmatprep.subr.bf16.mxu0 0
    %307 = vmatpush1.bf16.msra.mxu0 0
    %308 = vmatprep.subr.bf16.mxu0 0
    %309 = vmatpush1.bf16.msra.mxu0 %v290
    %310 = vmatprep.subr.bf16.mxu0 0
    %311 = vmatpush1.bf16.msra.mxu0 %v289
    %312 = vmatprep.subr.bf16.mxu0 0
    %313 = vmatpush2.bf16.msra.mxu0 0
    %314 = vmatprep.subr.bf16.mxu0 0
    %315 = vmatpush2.bf16.msra.mxu0 0
    %316 = vmatprep.subr.bf16.mxu0 0
    %317 = vmatpush2.bf16.msra.mxu0 0
    %318 = vmatprep.subr.bf16.mxu0 0
    %319 = vmatpush2.bf16.msra.mxu0 0
    %320 = vmatprep.subr.bf16.mxu0 0
    %321 = vmatpush2.bf16.msra.mxu0 0
    %322 = vmatprep.subr.bf16.mxu0 0
    %323 = vmatpush2.bf16.msra.mxu0 0
    %324 = vmatprep.subr.bf16.mxu0 0
    %325 = vmatpush2.bf16.msra.mxu0 0
    %326 = vmatprep.subr.bf16.mxu0 0
    %327 = vmatpush2.bf16.msra.mxu0 0
    %328 = vmatprep.mubr.bf16.mxu0 0
    %329 = vmatmul.mubr.bf16.gmra.mxu0 %v294
    %v330 = vpop.f32.mrf.mxu0
    %v331 = vadd.f32 0.0, %v330
    %v332 = vpop.f32.mrf.mxu0
    %v333 = vpop.f32.mrf.mxu0
    %v334 = vpop.f32.mrf.mxu0
    %335 = vdwg.mxu0
    %v336 = vadd.f32 %v254, %v331
    %v337 = vxor.u32 %v336, 2147483648
    %v338 = vmul.f32 %v337, 1.442695
    %v339 = vpow.pop %v338
    %v340 = vadd.f32 %v339, 1.0
    %v341 = vrcp.pop %v340
    %v342 = vmul.f32 1.0, %v341
    %v343 = vtanh.pop %v336
    %v344 = vmul.f32 %v342, 0.0
    %346 = vrot.lane.b32.xlu0 %v343, 64
    %v347 = vpop.permute.xlu0 %346
    %v349 = vmul.f32 %v342, %v347
    %351 = vrot.lane.b32.xlu0 %v349, 32
    %v352 = vpop.permute.xlu0 %351
    %v354 = vadd.f32 %v344, %v352
    %v355 = vtanh.pop %v354
    %357 = vrot.lane.b32.xlu0 %v355, 64
    %v358 = vpop.permute.xlu0 %357
    %v360 = vmul.f32 %v342, %v358
    %v361 = vpack.c.bf16 %v360, %v360
    %363 = vrot.lane.b32.xlu0 %v361, 32
    %v364 = vpop.permute.xlu0 %363
    %v366 = vsel %vm85, %v364, 0
    %368 = vmatprep.subr.bf16.mxu0 0
    %369 = vmatpush1.bf16.msra.mxu0 0
    %370 = vmatprep.subr.bf16.mxu0 0
    %371 = vmatpush1.bf16.msra.mxu0 0
    %372 = vmatprep.subr.bf16.mxu0 0
    %373 = vmatpush1.bf16.msra.mxu0 0
    %374 = vmatprep.subr.bf16.mxu0 0
    %375 = vmatpush1.bf16.msra.mxu0 0
    %376 = vmatprep.subr.bf16.mxu0 0
    %377 = vmatpush1.bf16.msra.mxu0 0
    %378 = vmatprep.subr.bf16.mxu0 0
    %379 = vmatpush1.bf16.msra.mxu0 0
    %380 = vmatprep.subr.bf16.mxu0 0
    %381 = vmatpush1.bf16.msra.mxu0 %v290
    %382 = vmatprep.subr.bf16.mxu0 0
    %383 = vmatpush1.bf16.msra.mxu0 %v289
    %384 = vmatprep.subr.bf16.mxu0 0
    %385 = vmatpush2.bf16.msra.mxu0 0
    %386 = vmatprep.subr.bf16.mxu0 0
    %387 = vmatpush2.bf16.msra.mxu0 0
    %388 = vmatprep.subr.bf16.mxu0 0
    %389 = vmatpush2.bf16.msra.mxu0 0
    %390 = vmatprep.subr.bf16.mxu0 0
    %391 = vmatpush2.bf16.msra.mxu0 0
    %392 = vmatprep.subr.bf16.mxu0 0
    %393 = vmatpush2.bf16.msra.mxu0 0
    %394 = vmatprep.subr.bf16.mxu0 0
    %395 = vmatpush2.bf16.msra.mxu0 0
    %396 = vmatprep.subr.bf16.mxu0 0
    %397 = vmatpush2.bf16.msra.mxu0 0
    %398 = vmatprep.subr.bf16.mxu0 0
    %399 = vmatpush2.bf16.msra.mxu0 0
    %400 = vmatprep.mubr.bf16.mxu0 0
    %401 = vmatmul.mubr.bf16.gmra.mxu0 %v366
    %v402 = vpop.f32.mrf.mxu0
    %v403 = vadd.f32 0.0, %v402
    %v404 = vpop.f32.mrf.mxu0
    %v405 = vpop.f32.mrf.mxu0
    %v406 = vpop.f32.mrf.mxu0
    %407 = vdwg.mxu0
    %v409 = vrot.slane %v403, 6
    %v411 = vadd.f32 %v254, %v409
    %v412 = vxor.u32 %v411, 2147483648
    %v413 = vmul.f32 %v412, 1.442695
    %v414 = vpow.pop %v413
    %v415 = vadd.f32 %v414, 1.0
    %v416 = vrcp.pop %v415
    %v417 = vmul.f32 1.0, %v416
    %v418 = vtanh.pop %v411
    %v420 = vrot.slane %v354, 6
    %v422 = vmul.f32 %v417, %v420
    %424 = vrot.lane.b32.xlu0 %v418, 64
    %v425 = vpop.permute.xlu0 %424
    %v427 = vmul.f32 %v417, %v425
    %429 = vrot.lane.b32.xlu0 %v427, 32
    %v430 = vpop.permute.xlu0 %429
    %v432 = vadd.f32 %v422, %v430
    %v433 = vtanh.pop %v432
    %435 = vrot.lane.b32.xlu0 %v433, 64
    %v436 = vpop.permute.xlu0 %435
    %v438 = vmul.f32 %v417, %v436
    %v440 = vrot.slane %v438, 2
    %v442 = vmax.f32 %v360, %v440
    %v443 = vpack.c.bf16 %v438, %v438
    %v445 = vrot.slane %v443, 1
    %446 = vrot.lane.b32.xlu0 %v445, 32
    %v447 = vpop.permute.xlu0 %446
    %v449 = vsel %vm85, %v447, 0
    %451 = vmatprep.subr.bf16.mxu0 0
    %452 = vmatpush1.bf16.msra.mxu0 0
    %453 = vmatprep.subr.bf16.mxu0 0
    %454 = vmatpush1.bf16.msra.mxu0 0
    %455 = vmatprep.subr.bf16.mxu0 0
    %456 = vmatpush1.bf16.msra.mxu0 0
    %457 = vmatprep.subr.bf16.mxu0 0
    %458 = vmatpush1.bf16.msra.mxu0 0
    %459 = vmatprep.subr.bf16.mxu0 0
    %460 = vmatpush1.bf16.msra.mxu0 0
    %461 = vmatprep.subr.bf16.mxu0 0
    %462 = vmatpush1.bf16.msra.mxu0 0
    %463 = vmatprep.subr.bf16.mxu0 0
    %464 = vmatpush1.bf16.msra.mxu0 %v290
    %465 = vmatprep.subr.bf16.mxu0 0
    %466 = vmatpush1.bf16.msra.mxu0 %v289
    %467 = vmatprep.subr.bf16.mxu0 0
    %468 = vmatpush2.bf16.msra.mxu0 0
    %469 = vmatprep.subr.bf16.mxu0 0
    %470 = vmatpush2.bf16.msra.mxu0 0
    %471 = vmatprep.subr.bf16.mxu0 0
    %472 = vmatpush2.bf16.msra.mxu0 0
    %473 = vmatprep.subr.bf16.mxu0 0
    %474 = vmatpush2.bf16.msra.mxu0 0
    %475 = vmatprep.subr.bf16.mxu0 0
    %476 = vmatpush2.bf16.msra.mxu0 0
    %477 = vmatprep.subr.bf16.mxu0 0
    %478 = vmatpush2.bf16.msra.mxu0 0
    %479 = vmatprep.subr.bf16.mxu0 0
    %480 = vmatpush2.bf16.msra.mxu0 0
    %481 = vmatprep.subr.bf16.mxu0 0
    %482 = vmatpush2.bf16.msra.mxu0 0
    %483 = vmatprep.mubr.bf16.mxu0 0
    %484 = vmatmul.mubr.bf16.gmra.mxu0 %v449
    %v485 = vpop.f32.mrf.mxu0
    %v486 = vadd.f32 0.0, %v485
    %v487 = vpop.f32.mrf.mxu0
    %v488 = vpop.f32.mrf.mxu0
    %v489 = vpop.f32.mrf.mxu0
    %490 = vdwg.mxu0
    %v492 = vrot.slane %v486, 4
    %v494 = vadd.f32 %v254, %v492
    %v495 = vxor.u32 %v494, 2147483648
    %v496 = vmul.f32 %v495, 1.442695
    %v497 = vpow.pop %v496
    %v498 = vadd.f32 %v497, 1.0
    %v499 = vrcp.pop %v498
    %v500 = vmul.f32 1.0, %v499
    %v501 = vtanh.pop %v494
    %v503 = vrot.slane %v432, 6
    %v505 = vmul.f32 %v500, %v503
    %507 = vrot.lane.b32.xlu0 %v501, 64
    %v508 = vpop.permute.xlu0 %507
    %v510 = vmul.f32 %v500, %v508
    %512 = vrot.lane.b32.xlu0 %v510, 32
    %v513 = vpop.permute.xlu0 %512
    %v515 = vadd.f32 %v505, %v513
    %v516 = vtanh.pop %v515
    %518 = vrot.lane.b32.xlu0 %v516, 64
    %v519 = vpop.permute.xlu0 %518
    %v521 = vmul.f32 %v500, %v519
    %v523 = vrot.slane %v521, 4
    %v525 = vmax.f32 %v442, %v523
    %v526 = vpack.c.bf16 %v521, %v521
    %v528 = vrot.slane %v526, 2
    %529 = vrot.lane.b32.xlu0 %v528, 32
    %v530 = vpop.permute.xlu0 %529
    %v532 = vsel %vm85, %v530, 0
    %534 = vmatprep.subr.bf16.mxu0 0
    %535 = vmatpush1.bf16.msra.mxu0 0
    %536 = vmatprep.subr.bf16.mxu0 0
    %537 = vmatpush1.bf16.msra.mxu0 0
    %538 = vmatprep.subr.bf16.mxu0 0
    %539 = vmatpush1.bf16.msra.mxu0 0
    %540 = vmatprep.subr.bf16.mxu0 0
    %541 = vmatpush1.bf16.msra.mxu0 0
    %542 = vmatprep.subr.bf16.mxu0 0
    %543 = vmatpush1.bf16.msra.mxu0 0
    %544 = vmatprep.subr.bf16.mxu0 0
    %545 = vmatpush1.bf16.msra.mxu0 0
    %546 = vmatprep.subr.bf16.mxu0 0
    %547 = vmatpush1.bf16.msra.mxu0 %v290
    %548 = vmatprep.subr.bf16.mxu0 0
    %549 = vmatpush1.bf16.msra.mxu0 %v289
    %550 = vmatprep.subr.bf16.mxu0 0
    %551 = vmatpush2.bf16.msra.mxu0 0
    %552 = vmatprep.subr.bf16.mxu0 0
    %553 = vmatpush2.bf16.msra.mxu0 0
    %554 = vmatprep.subr.bf16.mxu0 0
    %555 = vmatpush2.bf16.msra.mxu0 0
    %556 = vmatprep.subr.bf16.mxu0 0
    %557 = vmatpush2.bf16.msra.mxu0 0
    %558 = vmatprep.subr.bf16.mxu0 0
    %559 = vmatpush2.bf16.msra.mxu0 0
    %560 = vmatprep.subr.bf16.mxu0 0
    %561 = vmatpush2.bf16.msra.mxu0 0
    %562 = vmatprep.subr.bf16.mxu0 0
    %563 = vmatpush2.bf16.msra.mxu0 0
    %564 = vmatprep.subr.bf16.mxu0 0
    %565 = vmatpush2.bf16.msra.mxu0 0
    %566 = vmatprep.mubr.bf16.mxu0 0
    %567 = vmatmul.mubr.bf16.gmra.mxu0 %v532
    %v568 = vpop.f32.mrf.mxu0
    %v569 = vadd.f32 0.0, %v568
    %v570 = vpop.f32.mrf.mxu0
    %v571 = vpop.f32.mrf.mxu0
    %v572 = vpop.f32.mrf.mxu0
    %573 = vdwg.mxu0
    %v575 = vrot.slane %v569, 2
    %v577 = vadd.f32 %v254, %v575
    %v578 = vxor.u32 %v577, 2147483648
    %v579 = vmul.f32 %v578, 1.442695
    %v580 = vpow.pop %v579
    %v581 = vadd.f32 %v580, 1.0
    %v582 = vrcp.pop %v581
    %v583 = vmul.f32 1.0, %v582
    %v584 = vtanh.pop %v577
    %v586 = vrot.slane %v515, 6
    %v588 = vmul.f32 %v583, %v586
    %590 = vrot.lane.b32.xlu0 %v584, 64
    %v591 = vpop.permute.xlu0 %590
    %v593 = vmul.f32 %v583, %v591
    %595 = vrot.lane.b32.xlu0 %v593, 32
    %v596 = vpop.permute.xlu0 %595
    %v598 = vadd.f32 %v588, %v596
    %v599 = vtanh.pop %v598
    %601 = vrot.lane.b32.xlu0 %v599, 64
    %v602 = vpop.permute.xlu0 %601
    %v604 = vmul.f32 %v583, %v602
    %v606 = vrot.slane %v604, 6
    %v608 = vmax.f32 %v525, %v606
    %v609 = vpack.c.bf16 %v604, %v604
    %v611 = vrot.slane %v609, 3
    %612 = vrot.lane.b32.xlu0 %v611, 32
    %v613 = vpop.permute.xlu0 %612
    %v615 = vsel %vm85, %v613, 0
    %617 = vmatprep.subr.bf16.mxu0 0
    %618 = vmatpush1.bf16.msra.mxu0 0
    %619 = vmatprep.subr.bf16.mxu0 0
    %620 = vmatpush1.bf16.msra.mxu0 0
    %621 = vmatprep.subr.bf16.mxu0 0
    %622 = vmatpush1.bf16.msra.mxu0 0
    %623 = vmatprep.subr.bf16.mxu0 0
    %624 = vmatpush1.bf16.msra.mxu0 0
    %625 = vmatprep.subr.bf16.mxu0 0
    %626 = vmatpush1.bf16.msra.mxu0 0
    %627 = vmatprep.subr.bf16.mxu0 0
    %628 = vmatpush1.bf16.msra.mxu0 0
    %629 = vmatprep.subr.bf16.mxu0 0
    %630 = vmatpush1.bf16.msra.mxu0 %v290
    %631 = vmatprep.subr.bf16.mxu0 0
    %632 = vmatpush1.bf16.msra.mxu0 %v289
    %633 = vmatprep.subr.bf16.mxu0 0
    %634 = vmatpush2.bf16.msra.mxu0 0
    %635 = vmatprep.subr.bf16.mxu0 0
    %636 = vmatpush2.bf16.msra.mxu0 0
    %637 = vmatprep.subr.bf16.mxu0 0
    %638 = vmatpush2.bf16.msra.mxu0 0
    %639 = vmatprep.subr.bf16.mxu0 0
    %640 = vmatpush2.bf16.msra.mxu0 0
    %641 = vmatprep.subr.bf16.mxu0 0
    %642 = vmatpush2.bf16.msra.mxu0 0
    %643 = vmatprep.subr.bf16.mxu0 0
    %644 = vmatpush2.bf16.msra.mxu0 0
    %645 = vmatprep.subr.bf16.mxu0 0
    %646 = vmatpush2.bf16.msra.mxu0 0
    %647 = vmatprep.subr.bf16.mxu0 0
    %648 = vmatpush2.bf16.msra.mxu0 0
    %649 = vmatprep.mubr.bf16.mxu0 0
    %650 = vmatmul.mubr.bf16.gmra.mxu0 %v615
    %v651 = vpop.f32.mrf.mxu0
    %v652 = vadd.f32 0.0, %v651
    %v653 = vpop.f32.mrf.mxu0
    %v654 = vpop.f32.mrf.mxu0
    %v655 = vpop.f32.mrf.mxu0
    %656 = vdwg.mxu0
    %v657 = vadd.f32 %v255, %v652
    %v658 = vxor.u32 %v657, 2147483648
    %v659 = vmul.f32 %v658, 1.442695
    %v660 = vpow.pop %v659
    %v661 = vadd.f32 %v660, 1.0
    %v662 = vrcp.pop %v661
    %v663 = vmul.f32 1.0, %v662
    %v664 = vtanh.pop %v657
    %v666 = vrot.slane %v598, 6
    %v668 = vmul.f32 %v663, %v666
    %670 = vrot.lane.b32.xlu0 %v664, 64
    %v671 = vpop.permute.xlu0 %670
    %v673 = vmul.f32 %v663, %v671
    %675 = vrot.lane.b32.xlu0 %v673, 32
    %v676 = vpop.permute.xlu0 %675
    %v678 = vadd.f32 %v668, %v676
    %v679 = vtanh.pop %v678
    %681 = vrot.lane.b32.xlu0 %v679, 64
    %v682 = vpop.permute.xlu0 %681
    %v684 = vmul.f32 %v663, %v682
    %v685 = vmax.f32 %v608, %v684
    %v686 = vpack.c.bf16 %v684, %v684
    %688 = vrot.lane.b32.xlu0 %v686, 32
    %v689 = vpop.permute.xlu0 %688
    %v691 = vsel %vm85, %v689, 0
    %693 = vmatprep.subr.bf16.mxu0 0
    %694 = vmatpush1.bf16.msra.mxu0 0
    %695 = vmatprep.subr.bf16.mxu0 0
    %696 = vmatpush1.bf16.msra.mxu0 0
    %697 = vmatprep.subr.bf16.mxu0 0
    %698 = vmatpush1.bf16.msra.mxu0 0
    %699 = vmatprep.subr.bf16.mxu0 0
    %700 = vmatpush1.bf16.msra.mxu0 0
    %701 = vmatprep.subr.bf16.mxu0 0
    %702 = vmatpush1.bf16.msra.mxu0 0
    %703 = vmatprep.subr.bf16.mxu0 0
    %704 = vmatpush1.bf16.msra.mxu0 0
    %705 = vmatprep.subr.bf16.mxu0 0
    %706 = vmatpush1.bf16.msra.mxu0 %v290
    %707 = vmatprep.subr.bf16.mxu0 0
    %708 = vmatpush1.bf16.msra.mxu0 %v289
    %709 = vmatprep.subr.bf16.mxu0 0
    %710 = vmatpush2.bf16.msra.mxu0 0
    %711 = vmatprep.subr.bf16.mxu0 0
    %712 = vmatpush2.bf16.msra.mxu0 0
    %713 = vmatprep.subr.bf16.mxu0 0
    %714 = vmatpush2.bf16.msra.mxu0 0
    %715 = vmatprep.subr.bf16.mxu0 0
    %716 = vmatpush2.bf16.msra.mxu0 0
    %717 = vmatprep.subr.bf16.mxu0 0
    %718 = vmatpush2.bf16.msra.mxu0 0
    %719 = vmatprep.subr.bf16.mxu0 0
    %720 = vmatpush2.bf16.msra.mxu0 0
    %721 = vmatprep.subr.bf16.mxu0 0
    %722 = vmatpush2.bf16.msra.mxu0 0
    %723 = vmatprep.subr.bf16.mxu0 0
    %724 = vmatpush2.bf16.msra.mxu0 0
    %725 = vmatprep.mubr.bf16.mxu0 0
    %726 = vmatmul.mubr.bf16.gmra.mxu0 %v691
    %v727 = vpop.f32.mrf.mxu0
    %v728 = vadd.f32 0.0, %v727
    %v729 = vpop.f32.mrf.mxu0
    %v730 = vpop.f32.mrf.mxu0
    %v731 = vpop.f32.mrf.mxu0
    %732 = vdwg.mxu0
    %v734 = vrot.slane %v728, 6
    %v736 = vadd.f32 %v255, %v734
    %v737 = vxor.u32 %v736, 2147483648
    %v738 = vmul.f32 %v737, 1.442695
    %v739 = vpow.pop %v738
    %v740 = vadd.f32 %v739, 1.0
    %v741 = vrcp.pop %v740
    %v742 = vmul.f32 1.0, %v741
    %v743 = vtanh.pop %v736
    %v745 = vrot.slane %v678, 6
    %v747 = vmul.f32 %v742, %v745
    %749 = vrot.lane.b32.xlu0 %v743, 64
    %v750 = vpop.permute.xlu0 %749
    %v752 = vmul.f32 %v742, %v750
    %754 = vrot.lane.b32.xlu0 %v752, 32
    %v755 = vpop.permute.xlu0 %754
    %v757 = vadd.f32 %v747, %v755
    %v758 = vtanh.pop %v757
    %760 = vrot.lane.b32.xlu0 %v758, 64
    %v761 = vpop.permute.xlu0 %760
    %v763 = vmul.f32 %v742, %v761
    %v765 = vrot.slane %v763, 2
    %v767 = vmax.f32 %v685, %v765
    %v768 = vpack.c.bf16 %v763, %v763
    %v770 = vrot.slane %v768, 1
    %771 = vrot.lane.b32.xlu0 %v770, 32
    %v772 = vpop.permute.xlu0 %771
    %v774 = vsel %vm85, %v772, 0
    %776 = vmatprep.subr.bf16.mxu0 0
    %777 = vmatpush1.bf16.msra.mxu0 0
    %778 = vmatprep.subr.bf16.mxu0 0
    %779 = vmatpush1.bf16.msra.mxu0 0
    %780 = vmatprep.subr.bf16.mxu0 0
    %781 = vmatpush1.bf16.msra.mxu0 0
    %782 = vmatprep.subr.bf16.mxu0 0
    %783 = vmatpush1.bf16.msra.mxu0 0
    %784 = vmatprep.subr.bf16.mxu0 0
    %785 = vmatpush1.bf16.msra.mxu0 0
    %786 = vmatprep.subr.bf16.mxu0 0
    %787 = vmatpush1.bf16.msra.mxu0 0
    %788 = vmatprep.subr.bf16.mxu0 0
    %789 = vmatpush1.bf16.msra.mxu0 %v290
    %790 = vmatprep.subr.bf16.mxu0 0
    %791 = vmatpush1.bf16.msra.mxu0 %v289
    %792 = vmatprep.subr.bf16.mxu0 0
    %793 = vmatpush2.bf16.msra.mxu0 0
    %794 = vmatprep.subr.bf16.mxu0 0
    %795 = vmatpush2.bf16.msra.mxu0 0
    %796 = vmatprep.subr.bf16.mxu0 0
    %797 = vmatpush2.bf16.msra.mxu0 0
    %798 = vmatprep.subr.bf16.mxu0 0
    %799 = vmatpush2.bf16.msra.mxu0 0
    %800 = vmatprep.subr.bf16.mxu0 0
    %801 = vmatpush2.bf16.msra.mxu0 0
    %802 = vmatprep.subr.bf16.mxu0 0
    %803 = vmatpush2.bf16.msra.mxu0 0
    %804 = vmatprep.subr.bf16.mxu0 0
    %805 = vmatpush2.bf16.msra.mxu0 0
    %806 = vmatprep.subr.bf16.mxu0 0
    %807 = vmatpush2.bf16.msra.mxu0 0
    %808 = vmatprep.mubr.bf16.mxu0 0
    %809 = vmatmul.mubr.bf16.gmra.mxu0 %v774
    %v810 = vpop.f32.mrf.mxu0
    %v811 = vadd.f32 0.0, %v810
    %v812 = vpop.f32.mrf.mxu0
    %v813 = vpop.f32.mrf.mxu0
    %v814 = vpop.f32.mrf.mxu0
    %815 = vdwg.mxu0
    %v817 = vrot.slane %v811, 4
    %v819 = vadd.f32 %v255, %v817
    %v820 = vxor.u32 %v819, 2147483648
    %v821 = vmul.f32 %v820, 1.442695
    %v822 = vpow.pop %v821
    %v823 = vadd.f32 %v822, 1.0
    %v824 = vrcp.pop %v823
    %v825 = vmul.f32 1.0, %v824
    %v826 = vtanh.pop %v819
    %v828 = vrot.slane %v757, 6
    %v830 = vmul.f32 %v825, %v828
    %832 = vrot.lane.b32.xlu0 %v826, 64
    %v833 = vpop.permute.xlu0 %832
    %v835 = vmul.f32 %v825, %v833
    %837 = vrot.lane.b32.xlu0 %v835, 32
    %v838 = vpop.permute.xlu0 %837
    %v840 = vadd.f32 %v830, %v838
    %v841 = vtanh.pop %v840
    %843 = vrot.lane.b32.xlu0 %v841, 64
    %v844 = vpop.permute.xlu0 %843
    %v846 = vmul.f32 %v825, %v844
    %v848 = vrot.slane %v846, 4
    %v850 = vmax.f32 %v767, %v848
    %v851 = vpack.c.bf16 %v846, %v846
    %v853 = vrot.slane %v851, 2
    %854 = vrot.lane.b32.xlu0 %v853, 32
    %v855 = vpop.permute.xlu0 %854
    %v857 = vsel %vm85, %v855, 0
    %859 = vmatprep.subr.bf16.mxu0 0
    %860 = vmatpush1.bf16.msra.mxu0 0
    %861 = vmatprep.subr.bf16.mxu0 0
    %862 = vmatpush1.bf16.msra.mxu0 0
    %863 = vmatprep.subr.bf16.mxu0 0
    %864 = vmatpush1.bf16.msra.mxu0 0
    %865 = vmatprep.subr.bf16.mxu0 0
    %866 = vmatpush1.bf16.msra.mxu0 0
    %867 = vmatprep.subr.bf16.mxu0 0
    %868 = vmatpush1.bf16.msra.mxu0 0
    %869 = vmatprep.subr.bf16.mxu0 0
    %870 = vmatpush1.bf16.msra.mxu0 0
    %871 = vmatprep.subr.bf16.mxu0 0
    %872 = vmatpush1.bf16.msra.mxu0 %v290
    %873 = vmatprep.subr.bf16.mxu0 0
    %874 = vmatpush1.bf16.msra.mxu0 %v289
    %875 = vmatprep.subr.bf16.mxu0 0
    %876 = vmatpush2.bf16.msra.mxu0 0
    %877 = vmatprep.subr.bf16.mxu0 0
    %878 = vmatpush2.bf16.msra.mxu0 0
    %879 = vmatprep.subr.bf16.mxu0 0
    %880 = vmatpush2.bf16.msra.mxu0 0
    %881 = vmatprep.subr.bf16.mxu0 0
    %882 = vmatpush2.bf16.msra.mxu0 0
    %883 = vmatprep.subr.bf16.mxu0 0
    %884 = vmatpush2.bf16.msra.mxu0 0
    %885 = vmatprep.subr.bf16.mxu0 0
    %886 = vmatpush2.bf16.msra.mxu0 0
    %887 = vmatprep.subr.bf16.mxu0 0
    %888 = vmatpush2.bf16.msra.mxu0 0
    %889 = vmatprep.subr.bf16.mxu0 0
    %890 = vmatpush2.bf16.msra.mxu0 0
    %891 = vmatprep.mubr.bf16.mxu0 0
    %892 = vmatmul.mubr.bf16.gmra.mxu0 %v857
    %v893 = vpop.f32.mrf.mxu0
    %v894 = vadd.f32 0.0, %v893
    %v895 = vpop.f32.mrf.mxu0
    %v896 = vpop.f32.mrf.mxu0
    %v897 = vpop.f32.mrf.mxu0
    %898 = vdwg.mxu0
    %v900 = vrot.slane %v894, 2
    %v902 = vadd.f32 %v255, %v900
    %v903 = vxor.u32 %v902, 2147483648
    %v904 = vmul.f32 %v903, 1.442695
    %v905 = vpow.pop %v904
    %v906 = vadd.f32 %v905, 1.0
    %v907 = vrcp.pop %v906
    %v908 = vmul.f32 1.0, %v907
    %v909 = vtanh.pop %v902
    %v911 = vrot.slane %v840, 6
    %v913 = vmul.f32 %v908, %v911
    %915 = vrot.lane.b32.xlu0 %v909, 64
    %v916 = vpop.permute.xlu0 %915
    %v918 = vmul.f32 %v908, %v916
    %920 = vrot.lane.b32.xlu0 %v918, 32
    %v921 = vpop.permute.xlu0 %920
    %v923 = vadd.f32 %v913, %v921
    %v924 = vtanh.pop %v923
    %926 = vrot.lane.b32.xlu0 %v924, 64
    %v927 = vpop.permute.xlu0 %926
    %v929 = vmul.f32 %v908, %v927
    %v931 = vrot.slane %v929, 6
    %v933 = vmax.f32 %v850, %v931
    %v934 = vmax.f32 %v276, 0.0
    %v935 = vpack.c.bf16 %v934, %v934
    %v936 = vmax.f32 %v933, 0.0
    %v937 = vpack.c.bf16 %v936, %v936
    %v938 = vld [vmem:[%s7] sm:$0xf]
    %v939 = vld [vmem:[%s7 + $0x4] sm:$0xf]
    %v940 = vld [vmem:[%s8] sm:$0xf]
    %v941 = vld [vmem:[%s8 + $0x4] sm:$0xf]
    %v942 = vld [vmem:[%s8 + $0x8] sm:$0xf]
    %v943 = vld [vmem:[%s8 + $0xc] sm:$0xf]
    %945 = vrot.lane.b32.xlu0 %v937, 32
    %v946 = vpop.permute.xlu0 %945
    %v951 = vunpack.c.l.b16 %v940
    %v952 = vunpack.c.l.b16 %v941
    %v953 = vunpack.c.l.b16 %v942
    %v954 = vunpack.c.l.b16 %v943
    %v955 = vpack.c.b16 %v952, %v951
    %v956 = vpack.c.b16 %v954, %v953
    %v960 = vsel %vm85, %v946, 0
    %962 = vmatprep.subr.bf16.mxu0 0
    %963 = vmatpush1.bf16.msra.mxu0 0
    %964 = vmatprep.subr.bf16.mxu0 0
    %965 = vmatpush1.bf16.msra.mxu0 0
    %966 = vmatprep.subr.bf16.mxu0 0
    %967 = vmatpush1.bf16.msra.mxu0 0
    %968 = vmatprep.subr.bf16.mxu0 0
    %969 = vmatpush1.bf16.msra.mxu0 0
    %970 = vmatprep.subr.bf16.mxu0 0
    %971 = vmatpush1.bf16.msra.mxu0 0
    %972 = vmatprep.subr.bf16.mxu0 0
    %973 = vmatpush1.bf16.msra.mxu0 0
    %974 = vmatprep.subr.bf16.mxu0 0
    %975 = vmatpush1.bf16.msra.mxu0 %v956
    %976 = vmatprep.subr.bf16.mxu0 0
    %977 = vmatpush1.bf16.msra.mxu0 %v955
    %978 = vmatprep.subr.bf16.mxu0 0
    %979 = vmatpush2.bf16.msra.mxu0 0
    %980 = vmatprep.subr.bf16.mxu0 0
    %981 = vmatpush2.bf16.msra.mxu0 0
    %982 = vmatprep.subr.bf16.mxu0 0
    %983 = vmatpush2.bf16.msra.mxu0 0
    %984 = vmatprep.subr.bf16.mxu0 0
    %985 = vmatpush2.bf16.msra.mxu0 0
    %986 = vmatprep.subr.bf16.mxu0 0
    %987 = vmatpush2.bf16.msra.mxu0 0
    %988 = vmatprep.subr.bf16.mxu0 0
    %989 = vmatpush2.bf16.msra.mxu0 0
    %990 = vmatprep.subr.bf16.mxu0 0
    %991 = vmatpush2.bf16.msra.mxu0 0
    %992 = vmatprep.subr.bf16.mxu0 0
    %993 = vmatpush2.bf16.msra.mxu0 0
    %994 = vmatprep.mubr.bf16.mxu0 0
    %995 = vmatmul.mubr.bf16.gmra.mxu0 %v960
    %v996 = vpop.f32.mrf.mxu0
    %v997 = vadd.f32 0.0, %v996
    %v998 = vpop.f32.mrf.mxu0
    %v999 = vpop.f32.mrf.mxu0
    %v1000 = vpop.f32.mrf.mxu0
    %1001 = vdwg.mxu0
    %v1004 = vunpack.c.l.b16 %v938
    %v1005 = vunpack.c.l.b16 %v939
    %v1006 = vpack.c.b16 %v1005, %v1004
    %vm1008 = vcmask 130048
    %v1010 = vsel %vm1008, %v935, 0
    %1012 = vmatprep.subr.bf16.mxu0 0
    %1013 = vmatpush1.bf16.msra.mxu0 0
    %1014 = vmatprep.subr.bf16.mxu0 0
    %1015 = vmatpush1.bf16.msra.mxu0 0
    %1016 = vmatprep.subr.bf16.mxu0 0
    %1017 = vmatpush1.bf16.msra.mxu0 0
    %1018 = vmatprep.subr.bf16.mxu0 0
    %1019 = vmatpush1.bf16.msra.mxu0 0
    %1020 = vmatprep.subr.bf16.mxu0 0
    %1021 = vmatpush1.bf16.msra.mxu0 0
    %1022 = vmatprep.subr.bf16.mxu0 0
    %1023 = vmatpush1.bf16.msra.mxu0 0
    %1024 = vmatprep.subr.bf16.mxu0 0
    %1025 = vmatpush1.bf16.msra.mxu0 0
    %1026 = vmatprep.subr.bf16.mxu0 0
    %1027 = vmatpush1.bf16.msra.mxu0 %v1006
    %1028 = vmatprep.subr.bf16.mxu0 0
    %1029 = vmatpush2.bf16.msra.mxu0 0
    %1030 = vmatprep.subr.bf16.mxu0 0
    %1031 = vmatpush2.bf16.msra.mxu0 0
    %1032 = vmatprep.subr.bf16.mxu0 0
    %1033 = vmatpush2.bf16.msra.mxu0 0
    %1034 = vmatprep.subr.bf16.mxu0 0
    %1035 = vmatpush2.bf16.msra.mxu0 0
    %1036 = vmatprep.subr.bf16.mxu0 0
    %1037 = vmatpush2.bf16.msra.mxu0 0
    %1038 = vmatprep.subr.bf16.mxu0 0
    %1039 = vmatpush2.bf16.msra.mxu0 0
    %1040 = vmatprep.subr.bf16.mxu0 0
    %1041 = vmatpush2.bf16.msra.mxu0 0
    %1042 = vmatprep.subr.bf16.mxu0 0
    %1043 = vmatpush2.bf16.msra.mxu0 0
    %1044 = vmatprep.mubr.bf16.mxu0 0
    %1045 = vmatmul.mubr.bf16.gmra.mxu0 %v1010
    %v1046 = vpop.f32.mrf.mxu0
    %v1047 = vadd.f32 %v997, %v1046
    %v1048 = vpop.f32.mrf.mxu0
    %v1049 = vpop.f32.mrf.mxu0
    %v1050 = vpop.f32.mrf.mxu0
    %1051 = vdwg.mxu0
    %v1052 = vld [vmem:[%s9] sm:$0x1]
    %v1054 = vlaneseq
    %v1055 = vshrl.u32 %v1054, 7
    %v1056 = vsub.s32 0, %v1055
    %v1057 = vrot.slane %v1052, %v1056
    %v1059 = vadd.f32 %v1047, %v1057
    %1060 = vst [vmem:[#allocation2] sm:$0x3] %v1059
    // Predicated region
    $region42: #{textrcnn_forward.1} parent=1 // pred_check
      _
    $region43: #{textrcnn_forward.1} parent=1 // pred_check_branch
      %1062 = sbr.rel (0) target = $region45
    $region44: #{textrcnn_forward.1} parent=1 // pred_region
      %s1064 = ssub.s32 32, 32
      %1065 = vsyncadd [#allocation3], %s1064
      %s1067 = sshll.u32 [#allocation2], 4
      %s1068 = int_to_ptr.vmem [resolvable:$true] %s1067
      %1070 = dma.vmem_to_hbm [thread:$0]  %s1068, 32, %s10, [#allocation3]
    $region45: #{textrcnn_forward.1} parent=1 // pred_fallthru
      _
    // Predicated region
    $region46: #{textrcnn_forward.1} parent=1 // pred_check
      _
    $region47: #{textrcnn_forward.1} parent=1 // pred_check_branch
      %1072 = sbr.rel (0) target = $region49
    $region48: #{textrcnn_forward.1} parent=1 // pred_region
      %1073 = dma.done [#allocation3], 32
    $region49: #{textrcnn_forward.1} parent=1 // pred_fallthru
      _
    %1074 = vsyncpa [#allocation3], 1

</llo_original>
